<compile_context>
chip_gen: v7x
topology: tpu7x:2x2x1
jax: 0.10.0
libtpu: 0.0.40
codegen_flags: <defaults>
</compile_context>

<pallas_src>
import functools
import numpy as np
import jax
import jax.numpy as jnp
from jax.experimental import pallas as pl
from jax.experimental.pallas import tpu as pltpu


def _round_up(x, m):
    return (x + m - 1) // m * m


def _vmem_capacity_bytes():
    try:
        return int(pltpu.get_tpu_info().vmem_capacity_bytes)
    except Exception:          # conservative default = v7x per-core capacity
        return 64 * 1024 * 1024


# ----------------------------------------------------------------------------
# Deterministic parameter construction (librosa.filters.mel, htk=False,
# slaney norm -- same as the PyTorch module's get_mel_fn), done in numpy.
# ----------------------------------------------------------------------------
def _hz_to_mel_slaney(f):
    f = np.asarray(f, dtype=np.float64)
    f_sp = 200.0 / 3.0
    mels = f / f_sp
    min_log_hz = 1000.0
    min_log_mel = min_log_hz / f_sp
    logstep = np.log(6.4) / 27.0
    return np.where(f >= min_log_hz,
                    min_log_mel + np.log(np.maximum(f, 1e-10) / min_log_hz) / logstep,
                    mels)


def _mel_to_hz_slaney(m):
    m = np.asarray(m, dtype=np.float64)
    f_sp = 200.0 / 3.0
    freqs = m * f_sp
    min_log_hz = 1000.0
    min_log_mel = min_log_hz / f_sp
    logstep = np.log(6.4) / 27.0
    return np.where(m >= min_log_mel,
                    min_log_hz * np.exp(logstep * (m - min_log_mel)),
                    freqs)


def get_mel_fn(sr, n_fft, n_mels, fmin, fmax):
    if fmax is None:
        fmax = sr / 2.0
    n_freq = n_fft // 2 + 1
    fft_freqs = np.linspace(0.0, sr / 2.0, n_freq)
    mel_pts = np.linspace(_hz_to_mel_slaney(fmin), _hz_to_mel_slaney(fmax), n_mels + 2)
    hz_pts = _mel_to_hz_slaney(mel_pts)
    weights = np.zeros((n_mels, n_freq), dtype=np.float64)
    for i in range(n_mels):
        lower = (fft_freqs - hz_pts[i]) / max(hz_pts[i + 1] - hz_pts[i], 1e-10)
        upper = (hz_pts[i + 2] - fft_freqs) / max(hz_pts[i + 2] - hz_pts[i + 1], 1e-10)
        weights[i] = np.maximum(0.0, np.minimum(lower, upper))
    enorm = 2.0 / (hz_pts[2:n_mels + 2] - hz_pts[:n_mels])     # slaney normalization
    weights *= enorm[:, None]
    return weights.astype(np.float32)


def _hann_window_periodic(win_size):
    n = np.arange(win_size, dtype=np.float64)
    return 0.5 - 0.5 * np.cos(2.0 * np.pi * n / win_size)


# ----------------------------------------------------------------------------
# Pallas kernels.
#   Per frame tile:  frames @ [win*cos | -win*sin]   (MXU, per freq chunk,
#                    decomposed into R hop-sized shifted matmuls)
#                 -> |.| -> (. @ melT)  -> log(clamp(.))
# ----------------------------------------------------------------------------
def _dft_mel_tile(w, basis_ref, melT_ref, out_ref, *, clamp, hop, R, TF,
                  chunks, compute_dtype):
    """w: [TF + R - 1, hop] window rows (frame j == rows j .. j+R-1)."""
    acc = jnp.zeros(out_ref.shape, dtype=jnp.float32)
    for off, sz in chunks:                               # static, lane-aligned
        prod = jnp.zeros((TF, 2 * sz), dtype=jnp.float32)
        for r in range(R):                               # static hop-block loop
            lhs = w[r:r + TF, :] if R > 1 else w
            prod = prod + jnp.dot(
                lhs.astype(compute_dtype),
                basis_ref[r * hop:(r + 1) * hop, 2 * off:2 * (off + sz)],
                preferred_element_type=jnp.float32)
        re = prod[:, :sz]                                # 128-aligned splits
        im = prod[:, sz:]
        mag = jnp.sqrt(re * re + im * im)                # [TF, sz] f32
        acc = acc + jnp.dot(mag.astype(compute_dtype),
                            melT_ref[off:off + sz, :],
                            preferred_element_type=jnp.float32)
    out_ref[...] = jnp.log(jnp.maximum(acc, clamp))      # [TF, n_mels_pad] f32


def _mel_kernel_framed(wcur_ref, wnxt_ref, basis_ref, melT_ref, out_ref, *,
                       clamp, hop, R, TF, chunks, compute_dtype):
    # Overlapping frames rebuilt from this tile's hop-rows plus the first
    # R-1 hop-rows of the next tile.
    w = jnp.concatenate([wcur_ref[...], wnxt_ref[:R - 1, :]], axis=0)
    _dft_mel_tile(w, basis_ref, melT_ref, out_ref, clamp=clamp, hop=hop, R=R,
                  TF=TF, chunks=chunks, compute_dtype=compute_dtype)


def _mel_kernel_whole(frames_ref, basis_ref, melT_ref, out_ref, *,
                      clamp, n_fft, TF, chunks, compute_dtype):
    _dft_mel_tile(frames_ref[...], basis_ref, melT_ref, out_ref, clamp=clamp,
                  hop=n_fft, R=1, TF=TF, chunks=chunks,
                  compute_dtype=compute_dtype)


class MelAnalysis:
    def __init__(self, sampling_rate, win_size, hop_size, n_mels,
                 n_fft=None, mel_fmin=0.0, mel_fmax=None, clamp=1e-5,
                 dft_dtype=jnp.bfloat16, frame_tile=None, freq_chunk=512):
        n_fft = win_size if n_fft is None else n_fft
        self.sampling_rate = sampling_rate
        self.win_size = win_size
        self.hop_size = hop_size
        self.n_fft = n_fft
        self.n_mels = n_mels
        self.clamp = float(clamp)
        self.dft_dtype = jnp.dtype(dft_dtype)
        self.frame_tile = frame_tile        # None -> per-generation default

        n_freq = n_fft // 2 + 1
        n_freq_pad = _round_up(n_freq, 128)               # lane-aligned only
        fchunk = _round_up(min(int(freq_chunk), n_freq_pad), 128)
        chunks = []
        o = 0
        while o < n_freq_pad:
            sz = min(fchunk, n_freq_pad - o)              # ragged last chunk OK
            chunks.append((o, sz))
            o += sz
        n_mels_pad = _round_up(n_mels, 128)
        self.n_freq = n_freq
        self.n_freq_pad = n_freq_pad
        self.chunks = tuple(chunks)
        self.n_mels_pad = n_mels_pad

        # Hann window (periodic, == torch.hann_window), centered-padded to
        # n_fft (matches torch.stft when win_length < n_fft).
        win = np.zeros(n_fft, dtype=np.float64)
        left = (n_fft - win_size) // 2
        win[left:left + win_size] = _hann_window_periodic(win_size)

        # Windowed real-DFT bases, zero-padded to 128 lanes, laid out per
        # frequency chunk as [cos | -sin] so each (hop-block, chunk) pair needs
        # exactly one MXU matmul.
        n = np.arange(n_fft, dtype=np.float64)[:, None]
        k = np.arange(n_freq, dtype=np.float64)[None, :]
        ang = 2.0 * np.pi * n * k / n_fft
        cos_w = np.zeros((n_fft, n_freq_pad), dtype=np.float64)
        sin_w = np.zeros((n_fft, n_freq_pad), dtype=np.float64)
        cos_w[:, :n_freq] = win[:, None] * np.cos(ang)
        sin_w[:, :n_freq] = win[:, None] * (-np.sin(ang))
        basis = np.zeros((n_fft, 2 * n_freq_pad), dtype=np.float32)
        for off, sz in self.chunks:
            basis[:, 2 * off:2 * off + sz] = cos_w[:, off:off + sz]
            basis[:, 2 * off + sz:2 * (off + sz)] = sin_w[:, off:off + sz]
        self.basis = jnp.asarray(basis, dtype=self.dft_dtype)   # [n_fft, 2*n_freq_pad]

        # Transposed, padded mel filterbank: [n_freq_pad, n_mels_pad].
        mel = get_mel_fn(sampling_rate, n_fft, n_mels, mel_fmin, mel_fmax)
        melT = np.zeros((n_freq_pad, n_mels_pad), dtype=np.float32)
        melT[:n_freq, :n_mels] = mel.T
        self.melT = jnp.asarray(melT, dtype=self.dft_dtype)
        self.mel_basis = jnp.asarray(mel)                  # exact f32 (reference)

    # ---- VMEM footprint estimate (resident consts + pipelined tiles + live) ----
    def _vmem_estimate(self, TF, hop_k, R, two_streams, single_buffer_consts):
        bt = self.dft_dtype.itemsize
        consts = (1 if single_buffer_consts else 2) * (self.basis.size + self.melT.size) * bt
        n_in = 2 if two_streams else 1
        in_bt = 4 if two_streams else bt          # framed path keeps rows in f32
        tiles = n_in * 2 * TF * hop_k * in_bt + 2 * TF * self.n_mels_pad * 4
        max_sz = max(sz for _, sz in self.chunks)
        live = ((TF + R) * hop_k * 4
                + 3 * TF * 2 * max_sz * 4
                + 2 * TF * self.n_mels_pad * 4)
        return consts + tiles + live

    # ---- pallas_call wrapper ----
    def _run(self, inputs, kernel, n_steps, TF, hop_k, R, F_pad, two_streams,
             single_buffer_consts):
        est = self._vmem_estimate(TF, hop_k, R, two_streams, single_buffer_consts)
        cap = _vmem_capacity_bytes()
        vmem_limit = int(min(max(est * 5 // 4, 32 * 1024 * 1024), int(cap * 0.85)))

        const_kwargs = {}
        if single_buffer_consts:
            # Constant index map -> single buffer is enough; halves resident VMEM.
            const_kwargs["pipeline_mode"] = pl.Buffered(buffer_count=1)

        in_specs = [pl.BlockSpec((TF, hop_k), lambda i: (i, 0))]
        if two_streams:
            in_specs.append(pl.BlockSpec((TF, hop_k), lambda i: (i + 1, 0)))
        in_specs.append(pl.BlockSpec(self.basis.shape, lambda i: (0, 0), **const_kwargs))
        in_specs.append(pl.BlockSpec(self.melT.shape, lambda i: (0, 0), **const_kwargs))

        return pl.pallas_call(
            kernel,
            out_shape=jax.ShapeDtypeStruct((F_pad, self.n_mels_pad), jnp.float32),
            grid=(n_steps,),
            in_specs=in_specs,
            out_specs=pl.BlockSpec((TF, self.n_mels_pad), lambda i: (i, 0)),
            compiler_params=pltpu.CompilerParams(
                dimension_semantics=("parallel",),
                vmem_limit_bytes=vmem_limit),
        )(*inputs)

    def __call__(self, audio, mel_base="e"):
        audio = jnp.asarray(audio)
        if audio.ndim == 2:
            audio = audio[:, 0]        # stereo -> channel 0 (matches torch path)
        n_fft, hop = self.n_fft, self.hop_size
        pad_l = (self.win_size - hop) // 2
        pad_r = (self.win_size - hop + 1) // 2
        padded = jnp.pad(audio.astype(jnp.float32), (pad_l, pad_r), mode="reflect")
        L = int(padded.shape[0])
        F = 1 + (L - n_fft) // hop

        cap = _vmem_capacity_bytes()
        frame_tile = self.frame_tile
        if frame_tile is None:
            frame_tile = 512 if cap >= 96 * 1024 * 1024 else 256   # v5e/v6e vs v7x

        # Frame tile: >= ~4 grid steps (2 per TC on v7x megacore), multiple of 8.
        TF = min(int(frame_tile), _round_up(max((F + 3) // 4, 1), 8))

        in_kernel_framing = (n_fft % hop == 0)
        if in_kernel_framing:
            R = n_fft // hop
            if R - 1 > TF:
                TF = min(int(frame_tile), _round_up(R - 1, 8))
            if R - 1 > TF:
                in_kernel_framing = False      # hop far too small vs n_fft
        if not in_kernel_framing:
            R = 1
        hop_k = hop if in_kernel_framing else n_fft
        two_streams = in_kernel_framing and R > 1

        # Shrink TF if the VMEM footprint would exceed the chip's capacity.
        min_tf = _round_up(max(R - 1, 8), 8) if in_kernel_framing else 8
        while TF > min_tf and self._vmem_estimate(TF, hop_k, R, two_streams, True) > int(cap * 0.85):
            TF = max(min_tf, _round_up(TF // 2, 8))

        F_pad = _round_up(F, TF)
        n_steps = F_pad // TF

        if in_kernel_framing:
            # [rows, hop] view of the padded audio; no frame duplication in HBM.
            if two_streams:
                n_rows = _round_up(max(F_pad + TF, F + R), TF)
            else:
                n_rows = F_pad
            total = n_rows * hop_k
            padded_ext = jnp.pad(padded, (0, total - L)) if total > L else padded[:total]
            rows = padded_ext.reshape(n_rows, hop_k)       # stays f32 (cast per-slice in-kernel)
        else:
            # TODO(synk): generalize in-kernel framing to hop sizes that do not
            # divide n_fft (gcd-granularity row blocks); XLA gather fallback.
            idx = np.arange(F_pad)[:, None] * hop + np.arange(n_fft)[None, :]
            idx = np.minimum(idx, L - 1)
            rows = padded[idx].astype(self.dft_dtype)      # [F_pad, n_fft]

        if two_streams:
            inputs = [rows, rows, self.basis, self.melT]
            kernel = functools.partial(
                _mel_kernel_framed, clamp=self.clamp, hop=hop_k, R=R, TF=TF,
                chunks=self.chunks, compute_dtype=self.dft_dtype)
        else:
            inputs = [rows, self.basis, self.melT]
            kernel = functools.partial(
                _mel_kernel_whole, clamp=self.clamp, n_fft=hop_k, TF=TF,
                chunks=self.chunks, compute_dtype=self.dft_dtype)

        out = None
        last_err = None
        # Prefer single-buffered resident bases (pl.Buffered(1)); fall back to
        # default pipelining if this JAX/Mosaic build rejects it.
        for single_buffer in (True, False):
            try:
                out = self._run(inputs, kernel, n_steps, TF, hop_k, R, F_pad,
                                two_streams, single_buffer)
                break
            except Exception as e:            # noqa: BLE001
                last_err = e
        if out is None:
            raise last_err

        log_mel = out[:F, :self.n_mels].T                  # [n_mels, F]
        if mel_base != "e":
            assert mel_base in ["10", 10], "mel_base must be 'e', '10' or 10."
            log_mel = log_mel * 0.434294
        return log_mel


# ----------------------------------------------------------------------------
# Pure numpy reference (frame -> hann -> rfft -> |.| -> mel -> log clamp)
# ----------------------------------------------------------------------------
def _reference_log_mel(ma: MelAnalysis, audio):
    audio = np.asarray(audio, dtype=np.float64)
    if audio.ndim == 2:
        audio = audio[:, 0]
    pad_l = (ma.win_size - ma.hop_size) // 2
    pad_r = (ma.win_size - ma.hop_size + 1) // 2
    padded = np.pad(audio, (pad_l, pad_r), mode="reflect")
    F = 1 + (len(padded) - ma.n_fft) // ma.hop_size
    idx = np.arange(F)[:, None] * ma.hop_size + np.arange(ma.n_fft)[None, :]
    frames = padded[idx]
    win = np.zeros(ma.n_fft, dtype=np.float64)
    left = (ma.n_fft - ma.win_size) // 2
    win[left:left + ma.win_size] = _hann_window_periodic(ma.win_size)
    mag = np.abs(np.fft.rfft(frames * win[None, :], axis=-1))   # [F, n_freq]
    mel = np.asarray(ma.mel_basis, dtype=np.float64) @ mag.T    # [n_mels, F]
    return np.log(np.maximum(mel, ma.clamp))


if __name__ == "__main__":
    key = jax.random.PRNGKey(0)
    T = 256
    audio = jax.random.uniform(key, (T,), dtype=jnp.float32, minval=-1.0, maxval=1.0)

    # Exact-precision instance (f32 MXU operands) -> tight check vs numpy reference.
    ma_f32 = MelAnalysis(sampling_rate=16000, win_size=64, hop_size=16, n_mels=16,
                         dft_dtype=jnp.float32)
    log_mel_f32 = ma_f32(audio)                 # [n_mels, F] = [16, 16]
    jax.block_until_ready(log_mel_f32)
    assert log_mel_f32.shape == (16, 16), log_mel_f32.shape
    ref = _reference_log_mel(ma_f32, np.asarray(audio))
    err_f32 = float(np.max(np.abs(np.asarray(log_mel_f32) - ref)))
    assert np.allclose(np.asarray(log_mel_f32), ref, rtol=5e-3, atol=5e-3), err_f32

    # Default instance (bf16 MXU operands, f32 accumulate / epilogue).
    ma = MelAnalysis(sampling_rate=16000, win_size=64, hop_size=16, n_mels=16)
    log_mel = ma(audio)
    jax.block_until_ready(log_mel)
    assert log_mel.shape == (16, 16), log_mel.shape
    assert bool(jnp.all(jnp.isfinite(log_mel)))
    err = np.abs(np.asarray(log_mel) - ref)
    assert float(np.median(err)) < 5e-2 and float(np.max(err)) < 2.0, (
        float(np.median(err)), float(np.max(err)))

    # log10 base path (scalar rescale only).
    log_mel_10 = ma(audio, mel_base="10")
    jax.block_until_ready(log_mel_10)
    assert bool(jnp.all(jnp.isfinite(log_mel_10)))

    print("KERNEL_OK")
</pallas_src>

<mosaic_0001>
module attributes {stable_mosaic.version = 11 : i64} {
  func.func @_mel_kernel_framed(%arg0: i32, %arg1: memref<8x16xf32, #tpu.memory_space<vmem>>, %arg2: memref<8x16xf32, #tpu.memory_space<vmem>>, %arg3: memref<64x256xf32, #tpu.memory_space<vmem>>, %arg4: memref<128x128xf32, #tpu.memory_space<vmem>>, %arg5: memref<8x128xf32, #tpu.memory_space<vmem>>) attributes {dimension_semantics = [#tpu.dimension_semantics<parallel>], iteration_bounds = array<i64: 2>, scalar_prefetch = 0 : i64, scratch_operands = 0 : i64, tpu.core_type = #tpu.core_type<tc>, window_params = [{transform_indices = @transform_0, window_bounds = array<i64: 8, 16>}, {transform_indices = @transform_1, window_bounds = array<i64: 8, 16>}, {pipeline_mode = #tpu.pipeline_mode<synchronous>, transform_indices = @transform_2, window_bounds = array<i64: 64, 256>}, {pipeline_mode = #tpu.pipeline_mode<synchronous>, transform_indices = @transform_3, window_bounds = array<i64: 128, 128>}, {transform_indices = @transform_4, window_bounds = array<i64: 8, 128>}]} {
    %c0 = arith.constant 0 : index
    %c0_0 = arith.constant 0 : index
    %0 = vector.load %arg1[%c0, %c0_0] : memref<8x16xf32, #tpu.memory_space<vmem>>, vector<8x16xf32>
    %c0_1 = arith.constant 0 : index
    %c0_2 = arith.constant 0 : index
    %1 = vector.load %arg2[%c0_1, %c0_2] : memref<8x16xf32, #tpu.memory_space<vmem>>, vector<3x16xf32>
    %2 = tpu.concatenate %0, %1 in 0 : vector<8x16xf32>, vector<3x16xf32> -> vector<11x16xf32>
    %cst = arith.constant 0.000000e+00 : f32
    %3 = vector.broadcast %cst : f32 to vector<8x128xf32>
    %cst_3 = arith.constant 0.000000e+00 : f32
    %4 = vector.broadcast %cst_3 : f32 to vector<8x256xf32>
    %5 = vector.extract_strided_slice %2 {offsets = [0, 0], sizes = [8, 16], strides = [1, 1]} : vector<11x16xf32> to vector<8x16xf32>
    %c0_4 = arith.constant 0 : index
    %c0_5 = arith.constant 0 : index
    %6 = vector.load %arg3[%c0_4, %c0_5] : memref<64x256xf32, #tpu.memory_space<vmem>>, vector<16x256xf32>
    %cst_6 = arith.constant dense<0.000000e+00> : vector<8x256xf32>
    %7 = tpu.matmul %5, %6, %cst_6 {dimension_numbers = #tpu.dot_dimension_numbers<[1], [0], [0], [1], [0, 0, 1, 1], [], []>} : vector<8x16xf32>, vector<16x256xf32>, vector<8x256xf32> -> vector<8x256xf32>
    %8 = arith.addf %4, %7 : vector<8x256xf32>
    %9 = vector.extract_strided_slice %2 {offsets = [1, 0], sizes = [8, 16], strides = [1, 1]} : vector<11x16xf32> to vector<8x16xf32>
    %c16 = arith.constant 16 : index
    %c0_7 = arith.constant 0 : index
    %10 = vector.load %arg3[%c16, %c0_7] : memref<64x256xf32, #tpu.memory_space<vmem>>, vector<16x256xf32>
    %cst_8 = arith.constant dense<0.000000e+00> : vector<8x256xf32>
    %11 = tpu.matmul %9, %10, %cst_8 {dimension_numbers = #tpu.dot_dimension_numbers<[1], [0], [0], [1], [0, 0, 1, 1], [], []>} : vector<8x16xf32>, vector<16x256xf32>, vector<8x256xf32> -> vector<8x256xf32>
    %12 = arith.addf %8, %11 : vector<8x256xf32>
    %13 = vector.extract_strided_slice %2 {offsets = [2, 0], sizes = [8, 16], strides = [1, 1]} : vector<11x16xf32> to vector<8x16xf32>
    %c32 = arith.constant 32 : index
    %c0_9 = arith.constant 0 : index
    %14 = vector.load %arg3[%c32, %c0_9] : memref<64x256xf32, #tpu.memory_space<vmem>>, vector<16x256xf32>
    %cst_10 = arith.constant dense<0.000000e+00> : vector<8x256xf32>
    %15 = tpu.matmul %13, %14, %cst_10 {dimension_numbers = #tpu.dot_dimension_numbers<[1], [0], [0], [1], [0, 0, 1, 1], [], []>} : vector<8x16xf32>, vector<16x256xf32>, vector<8x256xf32> -> vector<8x256xf32>
    %16 = arith.addf %12, %15 : vector<8x256xf32>
    %17 = vector.extract_strided_slice %2 {offsets = [3, 0], sizes = [8, 16], strides = [1, 1]} : vector<11x16xf32> to vector<8x16xf32>
    %c48 = arith.constant 48 : index
    %c0_11 = arith.constant 0 : index
    %18 = vector.load %arg3[%c48, %c0_11] : memref<64x256xf32, #tpu.memory_space<vmem>>, vector<16x256xf32>
    %cst_12 = arith.constant dense<0.000000e+00> : vector<8x256xf32>
    %19 = tpu.matmul %17, %18, %cst_12 {dimension_numbers = #tpu.dot_dimension_numbers<[1], [0], [0], [1], [0, 0, 1, 1], [], []>} : vector<8x16xf32>, vector<16x256xf32>, vector<8x256xf32> -> vector<8x256xf32>
    %20 = arith.addf %16, %19 : vector<8x256xf32>
    %21 = vector.extract_strided_slice %20 {offsets = [0, 0], sizes = [8, 128], strides = [1, 1]} : vector<8x256xf32> to vector<8x128xf32>
    %22 = vector.extract_strided_slice %20 {offsets = [0, 128], sizes = [8, 128], strides = [1, 1]} : vector<8x256xf32> to vector<8x128xf32>
    %23 = arith.mulf %21, %21 : vector<8x128xf32>
    %24 = arith.mulf %22, %22 : vector<8x128xf32>
    %25 = arith.addf %23, %24 : vector<8x128xf32>
    %26 = math.sqrt %25 : vector<8x128xf32>
    %c0_13 = arith.constant 0 : index
    %c0_14 = arith.constant 0 : index
    %27 = vector.load %arg4[%c0_13, %c0_14] : memref<128x128xf32, #tpu.memory_space<vmem>>, vector<128x128xf32>
    %cst_15 = arith.constant dense<0.000000e+00> : vector<8x128xf32>
    %28 = tpu.matmul %26, %27, %cst_15 {dimension_numbers = #tpu.dot_dimension_numbers<[1], [0], [0], [1], [0, 0, 1, 1], [], []>} : vector<8x128xf32>, vector<128x128xf32>, vector<8x128xf32> -> vector<8x128xf32>
    %29 = arith.addf %3, %28 : vector<8x128xf32>
    %cst_16 = arith.constant 9.99999974E-6 : f32
    %30 = vector.broadcast %cst_16 : f32 to vector<8x128xf32>
    %31 = arith.maximumf %29, %30 : vector<8x128xf32>
    %32 = math.log %31 : vector<8x128xf32>
    %c0_17 = arith.constant 0 : index
    %c0_18 = arith.constant 0 : index
    %33 = vector.load %arg5[%c0_17, %c0_18] : memref<8x128xf32, #tpu.memory_space<vmem>>, vector<8x128xf32>
    tpu.vector_store %arg5[%c0_17, %c0_18], %32 {strides = array<i32>} : memref<8x128xf32, #tpu.memory_space<vmem>>, vector<8x128xf32>,
    return
  }
  func.func @transform_0(%arg0: i32) -> (i32, i32) {
    %c0_i32 = arith.constant 0 : i32
    %c0_i32_0 = arith.constant 0 : i32
    return %arg0, %c0_i32 : i32, i32
  }
  func.func @transform_1(%arg0: i32) -> (i32, i32) {
    %c1_i32 = arith.constant 1 : i32
    %0 = arith.addi %arg0, %c1_i32 : i32
    %c0_i32 = arith.constant 0 : i32
    %c0_i32_0 = arith.constant 0 : i32
    return %0, %c0_i32 : i32, i32
  }
  func.func @transform_2(%arg0: i32) -> (i32, i32) {
    %c0_i32 = arith.constant 0 : i32
    %c0_i32_0 = arith.constant 0 : i32
    %c0_i32_1 = arith.constant 0 : i32
    return %c0_i32, %c0_i32_0 : i32, i32
  }
  func.func @transform_3(%arg0: i32) -> (i32, i32) {
    %c0_i32 = arith.constant 0 : i32
    %c0_i32_0 = arith.constant 0 : i32
    %c0_i32_1 = arith.constant 0 : i32
    return %c0_i32, %c0_i32_0 : i32, i32
  }
  func.func @transform_4(%arg0: i32) -> (i32, i32) {
    %c0_i32 = arith.constant 0 : i32
    %c0_i32_0 = arith.constant 0 : i32
    return %arg0, %c0_i32 : i32, i32
  }
}

module attributes {stable_mosaic.version = 11 : i64} {
  func.func @_mel_kernel_framed(%arg0: i32, %arg1: memref<8x16xf32, #tpu.memory_space<vmem>>, %arg2: memref<8x16xf32, #tpu.memory_space<vmem>>, %arg3: memref<64x256xf32, #tpu.memory_space<vmem>>, %arg4: memref<128x128xf32, #tpu.memory_space<vmem>>, %arg5: memref<8x128xf32, #tpu.memory_space<vmem>>) attributes {dimension_semantics = [#tpu.dimension_semantics<parallel>], iteration_bounds = array<i64: 2>, scalar_prefetch = 0 : i64, scratch_operands = 0 : i64, tpu.core_type = #tpu.core_type<tc>, window_params = [{transform_indices = @transform_0, window_bounds = array<i64: 8, 16>}, {transform_indices = @transform_1, window_bounds = array<i64: 8, 16>}, {pipeline_mode = #tpu.pipeline_mode<synchronous>, transform_indices = @transform_2, window_bounds = array<i64: 64, 256>}, {pipeline_mode = #tpu.pipeline_mode<synchronous>, transform_indices = @transform_3, window_bounds = array<i64: 128, 128>}, {transform_indices = @transform_4, window_bounds = array<i64: 8, 128>}]} {
    %c0 = arith.constant 0 : index
    %c0_0 = arith.constant 0 : index
    %0 = vector.load %arg1[%c0, %c0_0] : memref<8x16xf32, #tpu.memory_space<vmem>>, vector<8x16xf32>
    %c0_1 = arith.constant 0 : index
    %c0_2 = arith.constant 0 : index
    %1 = vector.load %arg2[%c0_1, %c0_2] : memref<8x16xf32, #tpu.memory_space<vmem>>, vector<3x16xf32>
    %2 = tpu.concatenate %0, %1 in 0 : vector<8x16xf32>, vector<3x16xf32> -> vector<11x16xf32>
    %cst = arith.constant 0.000000e+00 : f32
    %3 = vector.broadcast %cst : f32 to vector<8x128xf32>
    %cst_3 = arith.constant 0.000000e+00 : f32
    %4 = vector.broadcast %cst_3 : f32 to vector<8x256xf32>
    %5 = vector.extract_strided_slice %2 {offsets = [0, 0], sizes = [8, 16], strides = [1, 1]} : vector<11x16xf32> to vector<8x16xf32>
    %c0_4 = arith.constant 0 : index
    %c0_5 = arith.constant 0 : index
    %6 = vector.load %arg3[%c0_4, %c0_5] : memref<64x256xf32, #tpu.memory_space<vmem>>, vector<16x256xf32>
    %cst_6 = arith.constant dense<0.000000e+00> : vector<8x256xf32>
    %7 = tpu.matmul %5, %6, %cst_6 {dimension_numbers = #tpu.dot_dimension_numbers<[1], [0], [0], [1], [0, 0, 1, 1], [], []>} : vector<8x16xf32>, vector<16x256xf32>, vector<8x256xf32> -> vector<8x256xf32>
    %8 = arith.addf %4, %7 : vector<8x256xf32>
    %9 = vector.extract_strided_slice %2 {offsets = [1, 0], sizes = [8, 16], strides = [1, 1]} : vector<11x16xf32> to vector<8x16xf32>
    %c16 = arith.constant 16 : index
    %c0_7 = arith.constant 0 : index
    %10 = vector.load %arg3[%c16, %c0_7] : memref<64x256xf32, #tpu.memory_space<vmem>>, vector<16x256xf32>
    %cst_8 = arith.constant dense<0.000000e+00> : vector<8x256xf32>
    %11 = tpu.matmul %9, %10, %cst_8 {dimension_numbers = #tpu.dot_dimension_numbers<[1], [0], [0], [1], [0, 0, 1, 1], [], []>} : vector<8x16xf32>, vector<16x256xf32>, vector<8x256xf32> -> vector<8x256xf32>
    %12 = arith.addf %8, %11 : vector<8x256xf32>
    %13 = vector.extract_strided_slice %2 {offsets = [2, 0], sizes = [8, 16], strides = [1, 1]} : vector<11x16xf32> to vector<8x16xf32>
    %c32 = arith.constant 32 : index
    %c0_9 = arith.constant 0 : index
    %14 = vector.load %arg3[%c32, %c0_9] : memref<64x256xf32, #tpu.memory_space<vmem>>, vector<16x256xf32>
    %cst_10 = arith.constant dense<0.000000e+00> : vector<8x256xf32>
    %15 = tpu.matmul %13, %14, %cst_10 {dimension_numbers = #tpu.dot_dimension_numbers<[1], [0], [0], [1], [0, 0, 1, 1], [], []>} : vector<8x16xf32>, vector<16x256xf32>, vector<8x256xf32> -> vector<8x256xf32>
    %16 = arith.addf %12, %15 : vector<8x256xf32>
    %17 = vector.extract_strided_slice %2 {offsets = [3, 0], sizes = [8, 16], strides = [1, 1]} : vector<11x16xf32> to vector<8x16xf32>
    %c48 = arith.constant 48 : index
    %c0_11 = arith.constant 0 : index
    %18 = vector.load %arg3[%c48, %c0_11] : memref<64x256xf32, #tpu.memory_space<vmem>>, vector<16x256xf32>
    %cst_12 = arith.constant dense<0.000000e+00> : vector<8x256xf32>
    %19 = tpu.matmul %17, %18, %cst_12 {dimension_numbers = #tpu.dot_dimension_numbers<[1], [0], [0], [1], [0, 0, 1, 1], [], []>} : vector<8x16xf32>, vector<16x256xf32>, vector<8x256xf32> -> vector<8x256xf32>
    %20 = arith.addf %16, %19 : vector<8x256xf32>
    %21 = vector.extract_strided_slice %20 {offsets = [0, 0], sizes = [8, 128], strides = [1, 1]} : vector<8x256xf32> to vector<8x128xf32>
    %22 = vector.extract_strided_slice %20 {offsets = [0, 128], sizes = [8, 128], strides = [1, 1]} : vector<8x256xf32> to vector<8x128xf32>
    %23 = arith.mulf %21, %21 : vector<8x128xf32>
    %24 = arith.mulf %22, %22 : vector<8x128xf32>
    %25 = arith.addf %23, %24 : vector<8x128xf32>
    %26 = math.sqrt %25 : vector<8x128xf32>
    %c0_13 = arith.constant 0 : index
    %c0_14 = arith.constant 0 : index
    %27 = vector.load %arg4[%c0_13, %c0_14] : memref<128x128xf32, #tpu.memory_space<vmem>>, vector<128x128xf32>
    %cst_15 = arith.constant dense<0.000000e+00> : vector<8x128xf32>
    %28 = tpu.matmul %26, %27, %cst_15 {dimension_numbers = #tpu.dot_dimension_numbers<[1], [0], [0], [1], [0, 0, 1, 1], [], []>} : vector<8x128xf32>, vector<128x128xf32>, vector<8x128xf32> -> vector<8x128xf32>
    %29 = arith.addf %3, %28 : vector<8x128xf32>
    %cst_16 = arith.constant 9.99999974E-6 : f32
    %30 = vector.broadcast %cst_16 : f32 to vector<8x128xf32>
    %31 = arith.maximumf %29, %30 : vector<8x128xf32>
    %32 = math.log %31 : vector<8x128xf32>
    %c0_17 = arith.constant 0 : index
    %c0_18 = arith.constant 0 : index
    %33 = vector.load %arg5[%c0_17, %c0_18] : memref<8x128xf32, #tpu.memory_space<vmem>>, vector<8x128xf32>
    tpu.vector_store %arg5[%c0_17, %c0_18], %32 {strides = array<i32>} : memref<8x128xf32, #tpu.memory_space<vmem>>, vector<8x128xf32>,
    return
  }
  func.func @transform_0(%arg0: i32) -> (i32, i32) {
    %c0_i32 = arith.constant 0 : i32
    %c0_i32_0 = arith.constant 0 : i32
    return %arg0, %c0_i32 : i32, i32
  }
  func.func @transform_1(%arg0: i32) -> (i32, i32) {
    %c1_i32 = arith.constant 1 : i32
    %0 = arith.addi %arg0, %c1_i32 : i32
    %c0_i32 = arith.constant 0 : i32
    %c0_i32_0 = arith.constant 0 : i32
    return %0, %c0_i32 : i32, i32
  }
  func.func @transform_2(%arg0: i32) -> (i32, i32) {
    %c0_i32 = arith.constant 0 : i32
    %c0_i32_0 = arith.constant 0 : i32
    %c0_i32_1 = arith.constant 0 : i32
    return %c0_i32, %c0_i32_0 : i32, i32
  }
  func.func @transform_3(%arg0: i32) -> (i32, i32) {
    %c0_i32 = arith.constant 0 : i32
    %c0_i32_0 = arith.constant 0 : i32
    %c0_i32_1 = arith.constant 0 : i32
    return %c0_i32, %c0_i32_0 : i32, i32
  }
  func.func @transform_4(%arg0: i32) -> (i32, i32) {
    %c0_i32 = arith.constant 0 : i32
    %c0_i32_0 = arith.constant 0 : i32
    return %arg0, %c0_i32 : i32, i32
  }
}

</mosaic_0001>

<llo_original>
// kernel: tpu_custom_call.1
$region0: #{tpu_custom_call.1}
  #allocation0 [shape = 'u32[]', space=smem, size = 0x4, offset = 0x4, fixed_abs, tag = 'smem constant byte address 0x4 - core index']
  #allocation1 [shape = 'u32[144,128]{1,0:T(1,128)}', space=vmem, size = 0x12000, scoped, tag = 'internal scratch']
  %s0 = inlined_call_operand.vmem [shape: f32[24,16], index: 0, kind: input, shape index: {}]
  %s1 = inlined_call_operand.vmem [shape: f32[24,16], index: 1, kind: input, shape index: {}]
  %s2 = inlined_call_operand.hbm [shape: f32[64,256], index: 2, kind: input, shape index: {}]
  %s3 = inlined_call_operand.hbm [shape: f32[128,128], index: 3, kind: input, shape index: {}]
  %s4 = inlined_call_operand.hbm [shape: f32[16,128], index: 4, kind: output, shape index: {}]
  %s5 = sld [smem:[#allocation0]]
  $region57: #{tpu_custom_call.1} parent=0
    _
  %s7 = ssub.s32 1, %s5
  %s8 = scalar_select 0, %s7, %s5
  $region1: #{tpu_custom_call.1} parent=0
    #allocation2 [shape = 'u8[65536]{0}', space=vmem, size = 0x10000, scoped, tag = 'input window, operand 2, single buffered']
    #allocation3 [shape = 's32[2]{0}', space=sflag, size = 0x8, scoped, tag = 'scoped memory for tpu_custom_call.1']
    #allocation4 [shape = 's32[2]{0}', space=sflag, size = 0x8, scoped, tag = 'scoped memory for tpu_custom_call.1']
    #allocation5 [shape = 'u8[65536]{0}', space=vmem, size = 0x10000, scoped, tag = 'input window, operand 3, single buffered']
    #allocation6 [shape = 's32[1]{0}', space=sflag, size = 0x4, scoped, tag = 'scoped memory for tpu_custom_call.1']
    #allocation7 [shape = 'u8[8192]{0}', space=vmem, size = 0x2000, scoped, tag = 'output window, operand 0']
    %9 = vsyncpa [#allocation3], 0
    %10 = vsyncpa [#allocation6], 0
    %11 = vsyncpa [#allocation4], 0
    %s12 = scalar_lea.sflag [#allocation4], 1
    %13 = vsyncpa %s12, 0
    loop: start=0, step=1, limit=4
    $region2: #{tpu_custom_call.1} parent=1 // loop_pre_header
      _
    $region3: #{tpu_custom_call.1} parent=1 // loop_header
      %s15 = sphi 0, %s19
      %p16 = scmp.ge.s32.totalorder %s15, 4
      %s25 = sphi 0, %s27
      %s28 = sphi 0, %s25
      %s29 = sphi 0, %s28
      %s45 = sphi 0, %s29
      %s53 = sphi 0, %s55
      %s56 = sphi 0, %s53
      %s57 = sphi 0, %s56
      %s73 = sphi 0, %s57
      %s77 = sphi 0, %s77
      %s79 = sphi 0, %s77
      %s80 = sphi 0, %s79
      %s94 = sphi 0, %s80
      %s98 = sphi 0, %s98
      %s100 = sphi 0, %s98
      %s101 = sphi 0, %s100
      %s115 = sphi 0, %s101
      %s121 = sphi 0, %s123
      %s124 = sphi 0, %s121
      %s125 = sphi 0, %s124
      %s141 = sphi 0, %s125
    $region4: #{tpu_custom_call.1} parent=1 // loop_header_branch
      %18 = sbr.rel (%p16) target = $region8
    $region5: #{tpu_custom_call.1} parent=1 // loop_body
      %s20 = ssub.s32 %s15, 1
      %s21 = ssub.s32 %s15, 2
      %s22 = sadd.s32 %s15, 1
      %s23 = ssub.s32 %s15, %s22
      %p24 = scmp.eq.s32.totalorder %s23, 0
      %s26 = sadd.s32 %s25, 1
      %s27 = scalar_select %p24, %s25, %s26
      %p30 = pneg %p24
      %p31 = scmp.eq.s32.totalorder %s15, 1
      %p32 = por %p30, %p31
      %p33 = scmp.ne.s32.totalorder %s25, %s28
      %p34 = scmp.eq.s32.totalorder %s15, 0
      %p35 = por %p33, %p34
      %p36 = scmp.ne.s32.totalorder %s25, %s28
      %p37 = scmp.eq.s32.totalorder %s20, 1
      %p38 = por %p36, %p37
      %p39 = scmp.ne.s32.totalorder %s28, %s29
      %p40 = scmp.eq.s32.totalorder %s20, 0
      %p41 = por %p39, %p40
      %p42 = scmp.ne.s32.totalorder %s28, %s29
      %p43 = scmp.eq.s32.totalorder %s21, 1
      %p44 = por %p42, %p43
      %p46 = scmp.ne.s32.totalorder %s29, %s45
      %p47 = scmp.eq.s32.totalorder %s21, 0
      %p48 = por %p46, %p47
      %s49 = sadd.s32 %s15, 1
      %s50 = sadd.s32 %s22, 1
      %s51 = ssub.s32 %s49, %s50
      %p52 = scmp.eq.s32.totalorder %s51, 0
      %s54 = sadd.s32 %s53, 1
      %s55 = scalar_select %p52, %s53, %s54
      %p58 = pneg %p52
      %p59 = scmp.eq.s32.totalorder %s15, 1
      %p60 = por %p58, %p59
      %p61 = scmp.ne.s32.totalorder %s53, %s56
      %p62 = scmp.eq.s32.totalorder %s15, 0
      %p63 = por %p61, %p62
      %p64 = scmp.ne.s32.totalorder %s53, %s56
      %p65 = scmp.eq.s32.totalorder %s20, 1
      %p66 = por %p64, %p65
      %p67 = scmp.ne.s32.totalorder %s56, %s57
      %p68 = scmp.eq.s32.totalorder %s20, 0
      %p69 = por %p67, %p68
      %p70 = scmp.ne.s32.totalorder %s56, %s57
      %p71 = scmp.eq.s32.totalorder %s21, 1
      %p72 = por %p70, %p71
      %p74 = scmp.ne.s32.totalorder %s57, %s73
      %p75 = scmp.eq.s32.totalorder %s21, 0
      %p76 = por %p74, %p75
      %s78 = sadd.s32 %s77, 1
      %p81 = scmp.eq.s32.totalorder %s15, 1
      %p82 = scmp.ne.s32.totalorder %s77, %s79
      %p83 = scmp.eq.s32.totalorder %s15, 0
      %p84 = por %p82, %p83
      %p85 = scmp.ne.s32.totalorder %s77, %s79
      %p86 = scmp.eq.s32.totalorder %s20, 1
      %p87 = por %p85, %p86
      %p88 = scmp.ne.s32.totalorder %s79, %s80
      %p89 = scmp.eq.s32.totalorder %s20, 0
      %p90 = por %p88, %p89
      %p91 = scmp.ne.s32.totalorder %s79, %s80
      %p92 = scmp.eq.s32.totalorder %s21, 1
      %p93 = por %p91, %p92
      %p95 = scmp.ne.s32.totalorder %s80, %s94
      %p96 = scmp.eq.s32.totalorder %s21, 0
      %p97 = por %p95, %p96
      %s99 = sadd.s32 %s98, 1
      %p102 = scmp.eq.s32.totalorder %s15, 1
      %p103 = scmp.ne.s32.totalorder %s98, %s100
      %p104 = scmp.eq.s32.totalorder %s15, 0
      %p105 = por %p103, %p104
      %p106 = scmp.ne.s32.totalorder %s98, %s100
      %p107 = scmp.eq.s32.totalorder %s20, 1
      %p108 = por %p106, %p107
      %p109 = scmp.ne.s32.totalorder %s100, %s101
      %p110 = scmp.eq.s32.totalorder %s20, 0
      %p111 = por %p109, %p110
      %p112 = scmp.ne.s32.totalorder %s100, %s101
      %p113 = scmp.eq.s32.totalorder %s21, 1
      %p114 = por %p112, %p113
      %p116 = scmp.ne.s32.totalorder %s101, %s115
      %p117 = scmp.eq.s32.totalorder %s21, 0
      %p118 = por %p116, %p117
      %s119 = ssub.s32 %s15, %s22
      %p120 = scmp.eq.s32.totalorder %s119, 0
      %s122 = sadd.s32 %s121, 1
      %s123 = scalar_select %p120, %s121, %s122
      %p126 = pneg %p120
      %p127 = scmp.eq.s32.totalorder %s15, 1
      %p128 = por %p126, %p127
      %p129 = scmp.ne.s32.totalorder %s121, %s124
      %p130 = scmp.eq.s32.totalorder %s15, 0
      %p131 = por %p129, %p130
      %p132 = scmp.ne.s32.totalorder %s121, %s124
      %p133 = scmp.eq.s32.totalorder %s20, 1
      %p134 = por %p132, %p133
      %p135 = scmp.ne.s32.totalorder %s124, %s125
      %p136 = scmp.eq.s32.totalorder %s20, 0
      %p137 = por %p135, %p136
      %p138 = scmp.ne.s32.totalorder %s124, %s125
      %p139 = scmp.eq.s32.totalorder %s21, 1
      %p140 = por %p138, %p139
      %p142 = scmp.ne.s32.totalorder %s125, %s141
      %p143 = scmp.eq.s32.totalorder %s21, 0
      %p144 = por %p142, %p143
      %p145 = scmp.le.s32.totalorder 1, %s15
      %p146 = scmp.lt.s32.totalorder %s15, 3
      %p147 = pnand %p145, %p146
      %p148 = pneg %p147
      // Predicated region
      $region9: #{tpu_custom_call.1} parent=5 // pred_check
        _
      $region10: #{tpu_custom_call.1} parent=5 // pred_check_branch
        %150 = sbr.rel (%p147) target = $region12
      $region11: #{tpu_custom_call.1} parent=5 // pred_region
        %s151 = ssub.s32 %s15, 1
        // Predicated region
        $region13: #{tpu_custom_call.1} parent=11 // pred_check
          %p152 = pneg %p90
        $region14: #{tpu_custom_call.1} parent=11 // pred_check_branch
          %154 = sbr.rel (%p152) target = $region16
        $region15: #{tpu_custom_call.1} parent=11 // pred_region
          %s156 = ssub.s32 2048, 2048
          %157 = vsyncadd [#allocation3], %s156
          %s158 = sshll.u32 [#allocation2], 4
          %s159 = int_to_ptr.vmem [resolvable:$true] %s158
          %164 = dma.hbm_to_vmem [thread:$0]  %s2, 2048, %s159, [#allocation3], 256, 256, 16
        $region16: #{tpu_custom_call.1} parent=11 // pred_fallthru
          _
        // Predicated region
        $region17: #{tpu_custom_call.1} parent=11 // pred_check
          %p165 = pneg %p111
        $region18: #{tpu_custom_call.1} parent=11 // pred_check_branch
          %167 = sbr.rel (%p165) target = $region20
        $region19: #{tpu_custom_call.1} parent=11 // pred_region
          %s169 = ssub.s32 2048, 2048
          %170 = vsyncadd [#allocation6], %s169
          %s171 = sshll.u32 [#allocation5], 4
          %s172 = int_to_ptr.vmem [resolvable:$true] %s171
          %177 = dma.hbm_to_vmem [thread:$0]  %s3, 2048, %s172, [#allocation6], 128, 128, 8
        $region20: #{tpu_custom_call.1} parent=11 // pred_fallthru
          _
      $region12: #{tpu_custom_call.1} parent=5 // pred_fallthru
        _
      %p178 = scmp.lt.s32.totalorder %s15, 2
      // Predicated region
      $region21: #{tpu_custom_call.1} parent=5 // pred_check
        %p179 = pneg %p178
      $region22: #{tpu_custom_call.1} parent=5 // pred_check_branch
        %181 = sbr.rel (%p179) target = $region24
      $region23: #{tpu_custom_call.1} parent=5 // pred_region
        // Predicated region
        $region25: #{tpu_custom_call.1} parent=23 // pred_check
          %p182 = pneg %p35
        $region26: #{tpu_custom_call.1} parent=23 // pred_check_branch
          %184 = sbr.rel (%p182) target = $region28
        $region27: #{tpu_custom_call.1} parent=23 // pred_region
          %p185 = scmp.lt.s32.totalorder %s15, 2
          %s186 = scalar_select %p185, %s15, 2
          %s187 = smul.addr %s186, 8
          %s188 = scalar_lea.vmem %s0, %s187
        $region28: #{tpu_custom_call.1} parent=23 // pred_fallthru
          _
        // Predicated region
        $region29: #{tpu_custom_call.1} parent=23 // pred_check
          %p189 = pneg %p63
        $region30: #{tpu_custom_call.1} parent=23 // pred_check_branch
          %191 = sbr.rel (%p189) target = $region32
        $region31: #{tpu_custom_call.1} parent=23 // pred_region
          %s192 = sadd.s32 %s15, 1
          %p193 = scmp.lt.s32.totalorder %s192, 2
          %s194 = scalar_select %p193, %s192, 2
          %s195 = smul.addr %s194, 8
          %s196 = scalar_lea.vmem %s1, %s195
          %s197 = sadd.s32 %s15, 1
        $region32: #{tpu_custom_call.1} parent=23 // pred_fallthru
          _
      $region24: #{tpu_custom_call.1} parent=5 // pred_fallthru
        _
      %p198 = scmp.le.s32.totalorder 1, %s15
      %p199 = scmp.lt.s32.totalorder %s15, 3
      %p200 = pnand %p198, %p199
      %p201 = pneg %p200
      // Predicated region
      $region33: #{tpu_custom_call.1} parent=5 // pred_check
        _
      $region34: #{tpu_custom_call.1} parent=5 // pred_check_branch
        %203 = sbr.rel (%p200) target = $region36
      $region35: #{tpu_custom_call.1} parent=5 // pred_region
        %s204 = ssub.s32 %s15, 1
        // Predicated region
        $region37: #{tpu_custom_call.1} parent=35 // pred_check
          %p205 = pneg %p90
        $region38: #{tpu_custom_call.1} parent=35 // pred_check_branch
          %207 = sbr.rel (%p205) target = $region40
        $region39: #{tpu_custom_call.1} parent=35 // pred_region
          %208 = dma.done [#allocation3], 2048
        $region40: #{tpu_custom_call.1} parent=35 // pred_fallthru
          _
        // Predicated region
        $region41: #{tpu_custom_call.1} parent=35 // pred_check
          %p209 = pneg %p111
        $region42: #{tpu_custom_call.1} parent=35 // pred_check_branch
          %211 = sbr.rel (%p209) target = $region44
        $region43: #{tpu_custom_call.1} parent=35 // pred_region
          %212 = dma.done [#allocation6], 2048
        $region44: #{tpu_custom_call.1} parent=35 // pred_fallthru
          _
        %p213 = scmp.lt.s32.totalorder %s20, 2
        %s214 = scalar_select %p213, %s20, 2
        %s215 = smul.addr %s214, 8
        %s216 = scalar_lea.vmem %s0, %s215
        %p217 = pneg %p41
        %p218 = pneg %p38
        %s219 = sadd.s32 %s20, 1
        %p220 = scmp.lt.s32.totalorder %s219, 2
        %s221 = scalar_select %p220, %s219, 2
        %s222 = smul.addr %s221, 8
        %s223 = scalar_lea.vmem %s1, %s222
        %p224 = pneg %p69
        %p225 = pneg %p66
        %p226 = pneg %p90
        %p227 = pneg %p87
        %p228 = pneg %p111
        %p229 = pneg %p108
        %p230 = pneg %p137
        %p231 = pneg %p134
        %s232 = sand.u32 %s124, 1
        %s233 = scalar_lea.sflag [#allocation4], %s232
        %s234 = sand.u32 %s124, 1
        %s235 = smul.addr %s234, 8
        %s236 = scalar_lea.vmem [#allocation7], %s235
        %p237 = scmp.lt.s32.totalorder %s20, 2
        %s238 = scalar_select %p237, %s20, 2
        %s239 = smul.addr %s238, 8
        %s240 = scalar_lea.vmem %s0, %s239
        %s241 = sadd.s32 %s20, 1
        %p242 = scmp.lt.s32.totalorder %s241, 2
        %s243 = scalar_select %p242, %s241, 2
        %s244 = smul.addr %s243, 8
        %s245 = scalar_lea.vmem %s1, %s244
        %s246 = sadd.s32 %s20, 1
        %v247 = vld [vmem:[%s240] sm:$0xff]
        %v248 = vld [vmem:[%s245] sm:$0x7]
        %v249 = vld [vmem:[#allocation2] sm:$0xff]
        %v250 = vld [vmem:[#allocation2 + $0x8] sm:$0xff]
        %v251 = vld [vmem:[#allocation2 + $0x10] sm:$0xff]
        %v252 = vld [vmem:[#allocation2 + $0x18] sm:$0xff]
        %v253 = vld [vmem:[#allocation2 + $0x20] sm:$0xff]
        %v254 = vld [vmem:[#allocation2 + $0x28] sm:$0xff]
        %v255 = vld [vmem:[#allocation2 + $0x30] sm:$0xff]
        %v256 = vld [vmem:[#allocation2 + $0x38] sm:$0xff]
        %vm259 = vcmask 1046528
        %v260 = vrot.slane %v247, 1
        %v261 = vrot.slane %v248, 1
        %v262 = vsel %vm259, %v260, %v261
        %vm263 = vcmask 130048
        %v264 = vsel %vm263, %v262, 0
        %266 = vmatprep.subr.mxu0 %v254
        %267 = vmatpush1.msra.mxu0 %v253
        %268 = vmatprep.subr.mxu0 %v256
        %269 = vmatpush1.msra.mxu0 %v255
        %270 = vmatprep.subr.mxu0 0.0
        %271 = vmatpush1.msra.mxu0 0.0
        %272 = vmatprep.subr.mxu0 0.0
        %273 = vmatpush1.msra.mxu0 0.0
        %274 = vmatprep.subr.mxu0 0.0
        %275 = vmatpush1.msra.mxu0 0.0
        %276 = vmatprep.subr.mxu0 0.0
        %277 = vmatpush1.msra.mxu0 0.0
        %278 = vmatprep.subr.mxu0 0.0
        %279 = vmatpush1.msra.mxu0 0.0
        %280 = vmatprep.subr.mxu0 0.0
        %281 = vmatpush1.msra.mxu0 0.0
        %282 = vmatprep.subr.mxu0 0.0
        %283 = vmatpush1.msra.mxu0 0.0
        %284 = vmatprep.subr.mxu0 0.0
        %285 = vmatpush1.msra.mxu0 0.0
        %286 = vmatprep.subr.mxu0 0.0
        %287 = vmatpush1.msra.mxu0 0.0
        %288 = vmatprep.subr.mxu0 0.0
        %289 = vmatpush1.msra.mxu0 0.0
        %290 = vmatprep.subr.mxu0 0.0
        %291 = vmatpush1.msra.mxu0 0.0
        %292 = vmatprep.subr.mxu0 0.0
        %293 = vmatpush1.msra.mxu0 0.0
        %294 = vmatprep.subr.mxu0 0.0
        %295 = vmatpush1.msra.mxu0 0.0
        %296 = vmatprep.subr.mxu0 0.0
        %297 = vmatpush1.msra.mxu0 0.0
        %298 = vmatprep.subr.mxu0 0.0
        %299 = vmatpush1.msra.mxu0 0.0
        %300 = vmatprep.subr.mxu0 0.0
        %301 = vmatpush1.msra.mxu0 0.0
        %302 = vmatprep.subr.mxu0 0.0
        %303 = vmatpush1.msra.mxu0 0.0
        %304 = vmatprep.subr.mxu0 0.0
        %305 = vmatpush1.msra.mxu0 0.0
        %306 = vmatprep.subr.mxu0 0.0
        %307 = vmatpush1.msra.mxu0 0.0
        %308 = vmatprep.subr.mxu0 0.0
        %309 = vmatpush1.msra.mxu0 0.0
        %310 = vmatprep.subr.mxu0 0.0
        %311 = vmatpush1.msra.mxu0 0.0
        %312 = vmatprep.subr.mxu0 0.0
        %313 = vmatpush1.msra.mxu0 0.0
        %314 = vmatprep.subr.mxu0 0.0
        %315 = vmatpush1.msra.mxu0 0.0
        %316 = vmatprep.subr.mxu0 0.0
        %317 = vmatpush1.msra.mxu0 0.0
        %318 = vmatprep.subr.mxu0 0.0
        %319 = vmatpush1.msra.mxu0 0.0
        %320 = vmatprep.subr.mxu0 0.0
        %321 = vmatpush1.msra.mxu0 0.0
        %322 = vmatprep.subr.mxu0 0.0
        %323 = vmatpush1.msra.mxu0 0.0
        %324 = vmatprep.subr.mxu0 0.0
        %325 = vmatpush1.msra.mxu0 0.0
        %326 = vmatprep.subr.mxu0 0.0
        %327 = vmatpush1.msra.mxu0 0.0
        %328 = vmatprep.subr.mxu0 0.0
        %329 = vmatpush1.msra.mxu0 0.0
        %330 = vmatprep.mubr.f32.mxu0 0.0
        %331 = vmatmul.mubr.f32.gmra.mrb[0].mxu0 %v264
        %v332 = vpop.f32.mrb[0].mxu0
        %v333 = vadd.f32 0.0, %v332
        %v334 = vpop.f32.mrb[0].mxu0
        %v335 = vadd.f32 0.0, %v334
        %336 = vdwg.mxu0
        %v337 = vsel %vm263, %v247, 0
        %339 = vmatprep.subr.mxu0 %v250
        %340 = vmatpush1.msra.mxu0 %v249
        %341 = vmatprep.subr.mxu0 %v252
        %342 = vmatpush1.msra.mxu0 %v251
        %343 = vmatprep.subr.mxu0 0.0
        %344 = vmatpush1.msra.mxu0 0.0
        %345 = vmatprep.subr.mxu0 0.0
        %346 = vmatpush1.msra.mxu0 0.0
        %347 = vmatprep.subr.mxu0 0.0
        %348 = vmatpush1.msra.mxu0 0.0
        %349 = vmatprep.subr.mxu0 0.0
        %350 = vmatpush1.msra.mxu0 0.0
        %351 = vmatprep.subr.mxu0 0.0
        %352 = vmatpush1.msra.mxu0 0.0
        %353 = vmatprep.subr.mxu0 0.0
        %354 = vmatpush1.msra.mxu0 0.0
        %355 = vmatprep.subr.mxu0 0.0
        %356 = vmatpush1.msra.mxu0 0.0
        %357 = vmatprep.subr.mxu0 0.0
        %358 = vmatpush1.msra.mxu0 0.0
        %359 = vmatprep.subr.mxu0 0.0
        %360 = vmatpush1.msra.mxu0 0.0
        %361 = vmatprep.subr.mxu0 0.0
        %362 = vmatpush1.msra.mxu0 0.0
        %363 = vmatprep.subr.mxu0 0.0
        %364 = vmatpush1.msra.mxu0 0.0
        %365 = vmatprep.subr.mxu0 0.0
        %366 = vmatpush1.msra.mxu0 0.0
        %367 = vmatprep.subr.mxu0 0.0
        %368 = vmatpush1.msra.mxu0 0.0
        %369 = vmatprep.subr.mxu0 0.0
        %370 = vmatpush1.msra.mxu0 0.0
        %371 = vmatprep.subr.mxu0 0.0
        %372 = vmatpush1.msra.mxu0 0.0
        %373 = vmatprep.subr.mxu0 0.0
        %374 = vmatpush1.msra.mxu0 0.0
        %375 = vmatprep.subr.mxu0 0.0
        %376 = vmatpush1.msra.mxu0 0.0
        %377 = vmatprep.subr.mxu0 0.0
        %378 = vmatpush1.msra.mxu0 0.0
        %379 = vmatprep.subr.mxu0 0.0
        %380 = vmatpush1.msra.mxu0 0.0
        %381 = vmatprep.subr.mxu0 0.0
        %382 = vmatpush1.msra.mxu0 0.0
        %383 = vmatprep.subr.mxu0 0.0
        %384 = vmatpush1.msra.mxu0 0.0
        %385 = vmatprep.subr.mxu0 0.0
        %386 = vmatpush1.msra.mxu0 0.0
        %387 = vmatprep.subr.mxu0 0.0
        %388 = vmatpush1.msra.mxu0 0.0
        %389 = vmatprep.subr.mxu0 0.0
        %390 = vmatpush1.msra.mxu0 0.0
        %391 = vmatprep.subr.mxu0 0.0
        %392 = vmatpush1.msra.mxu0 0.0
        %393 = vmatprep.subr.mxu0 0.0
        %394 = vmatpush1.msra.mxu0 0.0
        %395 = vmatprep.subr.mxu0 0.0
        %396 = vmatpush1.msra.mxu0 0.0
        %397 = vmatprep.subr.mxu0 0.0
        %398 = vmatpush1.msra.mxu0 0.0
        %399 = vmatprep.subr.mxu0 0.0
        %400 = vmatpush1.msra.mxu0 0.0
        %401 = vmatprep.subr.mxu0 0.0
        %402 = vmatpush1.msra.mxu0 0.0
        %403 = vmatprep.mubr.f32.mxu0 0.0
        %404 = vmatmul.mubr.f32.gmra.mrb[0].mxu0 %v337
        %v405 = vpop.f32.mrb[0].mxu0
        %v406 = vadd.f32 %v333, %v405
        %v407 = vpop.f32.mrb[0].mxu0
        %v408 = vadd.f32 %v335, %v407
        %409 = vdwg.mxu0
        %v410 = vld [vmem:[#allocation2 + $0x40] sm:$0xff]
        %v411 = vld [vmem:[#allocation2 + $0x48] sm:$0xff]
        %v412 = vld [vmem:[#allocation2 + $0x50] sm:$0xff]
        %v413 = vld [vmem:[#allocation2 + $0x58] sm:$0xff]
        %vm414 = vcmask 1045504
        %v415 = vrot.slane %v247, 2
        %v416 = vrot.slane %v248, 2
        %v417 = vsel %vm414, %v415, %v416
        %v418 = vsel %vm263, %v417, 0
        %420 = vmatprep.subr.mxu0 %v411
        %421 = vmatpush1.msra.mxu0 %v410
        %422 = vmatprep.subr.mxu0 %v413
        %423 = vmatpush1.msra.mxu0 %v412
        %424 = vmatprep.subr.mxu0 0.0
        %425 = vmatpush1.msra.mxu0 0.0
        %426 = vmatprep.subr.mxu0 0.0
        %427 = vmatpush1.msra.mxu0 0.0
        %428 = vmatprep.subr.mxu0 0.0
        %429 = vmatpush1.msra.mxu0 0.0
        %430 = vmatprep.subr.mxu0 0.0
        %431 = vmatpush1.msra.mxu0 0.0
        %432 = vmatprep.subr.mxu0 0.0
        %433 = vmatpush1.msra.mxu0 0.0
        %434 = vmatprep.subr.mxu0 0.0
        %435 = vmatpush1.msra.mxu0 0.0
        %436 = vmatprep.subr.mxu0 0.0
        %437 = vmatpush1.msra.mxu0 0.0
        %438 = vmatprep.subr.mxu0 0.0
        %439 = vmatpush1.msra.mxu0 0.0
        %440 = vmatprep.subr.mxu0 0.0
        %441 = vmatpush1.msra.mxu0 0.0
        %442 = vmatprep.subr.mxu0 0.0
        %443 = vmatpush1.msra.mxu0 0.0
        %444 = vmatprep.subr.mxu0 0.0
        %445 = vmatpush1.msra.mxu0 0.0
        %446 = vmatprep.subr.mxu0 0.0
        %447 = vmatpush1.msra.mxu0 0.0
        %448 = vmatprep.subr.mxu0 0.0
        %449 = vmatpush1.msra.mxu0 0.0
        %450 = vmatprep.subr.mxu0 0.0
        %451 = vmatpush1.msra.mxu0 0.0
        %452 = vmatprep.subr.mxu0 0.0
        %453 = vmatpush1.msra.mxu0 0.0
        %454 = vmatprep.subr.mxu0 0.0
        %455 = vmatpush1.msra.mxu0 0.0
        %456 = vmatprep.subr.mxu0 0.0
        %457 = vmatpush1.msra.mxu0 0.0
        %458 = vmatprep.subr.mxu0 0.0
        %459 = vmatpush1.msra.mxu0 0.0
        %460 = vmatprep.subr.mxu0 0.0
        %461 = vmatpush1.msra.mxu0 0.0
        %462 = vmatprep.subr.mxu0 0.0
        %463 = vmatpush1.msra.mxu0 0.0
        %464 = vmatprep.subr.mxu0 0.0
        %465 = vmatpush1.msra.mxu0 0.0
        %466 = vmatprep.subr.mxu0 0.0
        %467 = vmatpush1.msra.mxu0 0.0
        %468 = vmatprep.subr.mxu0 0.0
        %469 = vmatpush1.msra.mxu0 0.0
        %470 = vmatprep.subr.mxu0 0.0
        %471 = vmatpush1.msra.mxu0 0.0
        %472 = vmatprep.subr.mxu0 0.0
        %473 = vmatpush1.msra.mxu0 0.0
        %474 = vmatprep.subr.mxu0 0.0
        %475 = vmatpush1.msra.mxu0 0.0
        %476 = vmatprep.subr.mxu0 0.0
        %477 = vmatpush1.msra.mxu0 0.0
        %478 = vmatprep.subr.mxu0 0.0
        %479 = vmatpush1.msra.mxu0 0.0
        %480 = vmatprep.subr.mxu0 0.0
        %481 = vmatpush1.msra.mxu0 0.0
        %482 = vmatprep.subr.mxu0 0.0
        %483 = vmatpush1.msra.mxu0 0.0
        %484 = vmatprep.mubr.f32.mxu0 0.0
        %485 = vmatmul.mubr.f32.gmra.mrb[0].mxu0 %v418
        %v486 = vpop.f32.mrb[0].mxu0
        %v487 = vadd.f32 0.0, %v486
        %v488 = vpop.f32.mrb[0].mxu0
        %v489 = vadd.f32 0.0, %v488
        %490 = vdwg.mxu0
        %v491 = vadd.f32 %v406, %v487
        %v492 = vadd.f32 %v408, %v489
        %v493 = vld [vmem:[#allocation2 + $0x60] sm:$0xff]
        %v494 = vld [vmem:[#allocation2 + $0x68] sm:$0xff]
        %v495 = vld [vmem:[#allocation2 + $0x70] sm:$0xff]
        %v496 = vld [vmem:[#allocation2 + $0x78] sm:$0xff]
        %vm497 = vcmask 1044480
        %v498 = vrot.slane %v247, 3
        %v499 = vrot.slane %v248, 3
        %v500 = vsel %vm497, %v498, %v499
        %v501 = vsel %vm263, %v500, 0
        %503 = vmatprep.subr.mxu0 %v494
        %504 = vmatpush1.msra.mxu0 %v493
        %505 = vmatprep.subr.mxu0 %v496
        %506 = vmatpush1.msra.mxu0 %v495
        %507 = vmatprep.subr.mxu0 0.0
        %508 = vmatpush1.msra.mxu0 0.0
        %509 = vmatprep.subr.mxu0 0.0
        %510 = vmatpush1.msra.mxu0 0.0
        %511 = vmatprep.subr.mxu0 0.0
        %512 = vmatpush1.msra.mxu0 0.0
        %513 = vmatprep.subr.mxu0 0.0
        %514 = vmatpush1.msra.mxu0 0.0
        %515 = vmatprep.subr.mxu0 0.0
        %516 = vmatpush1.msra.mxu0 0.0
        %517 = vmatprep.subr.mxu0 0.0
        %518 = vmatpush1.msra.mxu0 0.0
        %519 = vmatprep.subr.mxu0 0.0
        %520 = vmatpush1.msra.mxu0 0.0
        %521 = vmatprep.subr.mxu0 0.0
        %522 = vmatpush1.msra.mxu0 0.0
        %523 = vmatprep.subr.mxu0 0.0
        %524 = vmatpush1.msra.mxu0 0.0
        %525 = vmatprep.subr.mxu0 0.0
        %526 = vmatpush1.msra.mxu0 0.0
        %527 = vmatprep.subr.mxu0 0.0
        %528 = vmatpush1.msra.mxu0 0.0
        %529 = vmatprep.subr.mxu0 0.0
        %530 = vmatpush1.msra.mxu0 0.0
        %531 = vmatprep.subr.mxu0 0.0
        %532 = vmatpush1.msra.mxu0 0.0
        %533 = vmatprep.subr.mxu0 0.0
        %534 = vmatpush1.msra.mxu0 0.0
        %535 = vmatprep.subr.mxu0 0.0
        %536 = vmatpush1.msra.mxu0 0.0
        %537 = vmatprep.subr.mxu0 0.0
        %538 = vmatpush1.msra.mxu0 0.0
        %539 = vmatprep.subr.mxu0 0.0
        %540 = vmatpush1.msra.mxu0 0.0
        %541 = vmatprep.subr.mxu0 0.0
        %542 = vmatpush1.msra.mxu0 0.0
        %543 = vmatprep.subr.mxu0 0.0
        %544 = vmatpush1.msra.mxu0 0.0
        %545 = vmatprep.subr.mxu0 0.0
        %546 = vmatpush1.msra.mxu0 0.0
        %547 = vmatprep.subr.mxu0 0.0
        %548 = vmatpush1.msra.mxu0 0.0
        %549 = vmatprep.subr.mxu0 0.0
        %550 = vmatpush1.msra.mxu0 0.0
        %551 = vmatprep.subr.mxu0 0.0
        %552 = vmatpush1.msra.mxu0 0.0
        %553 = vmatprep.subr.mxu0 0.0
        %554 = vmatpush1.msra.mxu0 0.0
        %555 = vmatprep.subr.mxu0 0.0
        %556 = vmatpush1.msra.mxu0 0.0
        %557 = vmatprep.subr.mxu0 0.0
        %558 = vmatpush1.msra.mxu0 0.0
        %559 = vmatprep.subr.mxu0 0.0
        %560 = vmatpush1.msra.mxu0 0.0
        %561 = vmatprep.subr.mxu0 0.0
        %562 = vmatpush1.msra.mxu0 0.0
        %563 = vmatprep.subr.mxu0 0.0
        %564 = vmatpush1.msra.mxu0 0.0
        %565 = vmatprep.subr.mxu0 0.0
        %566 = vmatpush1.msra.mxu0 0.0
        %567 = vmatprep.mubr.f32.mxu0 0.0
        %568 = vmatmul.mubr.f32.gmra.mrb[0].mxu0 %v501
        %v569 = vpop.f32.mrb[0].mxu0
        %v570 = vadd.f32 0.0, %v569
        %v571 = vpop.f32.mrb[0].mxu0
        %v572 = vadd.f32 0.0, %v571
        %573 = vdwg.mxu0
        %v574 = vadd.f32 %v491, %v570
        %v575 = vadd.f32 %v492, %v572
        %v576 = vmul.f32 %v574, %v574
        %v577 = vmul.f32 %v575, %v575
        %v578 = vadd.f32 %v576, %v577
        %v579 = vrsqrt.pop %v578
        %v580 = vmul.f32 %v578, %v579
        %vm581 = vcmp.eq.f32.partialorder %v578, inf
        %v582 = vsel %vm581, %v578, %v580
        %vm583 = vcmp.eq.f32.partialorder %v578, 0.0
        %v584 = vand.u32 %v578, 2147483648
        %v585 = vsel %vm583, %v584, %v582
        %v586 = vld [vmem:[#allocation5] sm:$0xff]
        %v587 = vld [vmem:[#allocation5 + $0x8] sm:$0xff]
        %v588 = vld [vmem:[#allocation5 + $0x10] sm:$0xff]
        %v589 = vld [vmem:[#allocation5 + $0x18] sm:$0xff]
        %v590 = vld [vmem:[#allocation5 + $0x20] sm:$0xff]
        %v591 = vld [vmem:[#allocation5 + $0x28] sm:$0xff]
        %v592 = vld [vmem:[#allocation5 + $0x30] sm:$0xff]
        %v593 = vld [vmem:[#allocation5 + $0x38] sm:$0xff]
        %v594 = vld [vmem:[#allocation5 + $0x40] sm:$0xff]
        %v595 = vld [vmem:[#allocation5 + $0x48] sm:$0xff]
        %v596 = vld [vmem:[#allocation5 + $0x50] sm:$0xff]
        %v597 = vld [vmem:[#allocation5 + $0x58] sm:$0xff]
        %v598 = vld [vmem:[#allocation5 + $0x60] sm:$0xff]
        %v599 = vld [vmem:[#allocation5 + $0x68] sm:$0xff]
        %v600 = vld [vmem:[#allocation5 + $0x70] sm:$0xff]
        %v601 = vld [vmem:[#allocation5 + $0x78] sm:$0xff]
        %602 = vmatprep.subr.mxu0 0.0
        %603 = vmatpush1.msra.mxu0 %v586
        %604 = vmatprep.subr.mxu0 0.0
        %605 = vmatpush1.msra.mxu0 %v587
        %606 = vmatprep.subr.mxu0 0.0
        %607 = vmatpush1.msra.mxu0 %v588
        %608 = vmatprep.subr.mxu0 0.0
        %609 = vmatpush1.msra.mxu0 %v589
        %610 = vmatprep.subr.mxu0 0.0
        %611 = vmatpush1.msra.mxu0 %v590
        %612 = vmatprep.subr.mxu0 0.0
        %613 = vmatpush1.msra.mxu0 %v591
        %614 = vmatprep.subr.mxu0 0.0
        %615 = vmatpush1.msra.mxu0 %v592
        %616 = vmatprep.subr.mxu0 0.0
        %617 = vmatpush1.msra.mxu0 %v593
        %618 = vmatprep.subr.mxu0 0.0
        %619 = vmatpush1.msra.mxu0 %v594
        %620 = vmatprep.subr.mxu0 0.0
        %621 = vmatpush1.msra.mxu0 %v595
        %622 = vmatprep.subr.mxu0 0.0
        %623 = vmatpush1.msra.mxu0 %v596
        %624 = vmatprep.subr.mxu0 0.0
        %625 = vmatpush1.msra.mxu0 %v597
        %626 = vmatprep.subr.mxu0 0.0
        %627 = vmatpush1.msra.mxu0 %v598
        %628 = vmatprep.subr.mxu0 0.0
        %629 = vmatpush1.msra.mxu0 %v599
        %630 = vmatprep.subr.mxu0 0.0
        %631 = vmatpush1.msra.mxu0 %v600
        %632 = vmatprep.subr.mxu0 0.0
        %633 = vmatpush1.msra.mxu0 %v601
        %634 = vmatprep.subr.mxu0 0.0
        %635 = vmatpush1.msra.mxu0 0.0
        %636 = vmatprep.subr.mxu0 0.0
        %637 = vmatpush1.msra.mxu0 0.0
        %638 = vmatprep.subr.mxu0 0.0
        %639 = vmatpush1.msra.mxu0 0.0
        %640 = vmatprep.subr.mxu0 0.0
        %641 = vmatpush1.msra.mxu0 0.0
        %642 = vmatprep.subr.mxu0 0.0
        %643 = vmatpush1.msra.mxu0 0.0
        %644 = vmatprep.subr.mxu0 0.0
        %645 = vmatpush1.msra.mxu0 0.0
        %646 = vmatprep.subr.mxu0 0.0
        %647 = vmatpush1.msra.mxu0 0.0
        %648 = vmatprep.subr.mxu0 0.0
        %649 = vmatpush1.msra.mxu0 0.0
        %650 = vmatprep.subr.mxu0 0.0
        %651 = vmatpush1.msra.mxu0 0.0
        %652 = vmatprep.subr.mxu0 0.0
        %653 = vmatpush1.msra.mxu0 0.0
        %654 = vmatprep.subr.mxu0 0.0
        %655 = vmatpush1.msra.mxu0 0.0
        %656 = vmatprep.subr.mxu0 0.0
        %657 = vmatpush1.msra.mxu0 0.0
        %658 = vmatprep.subr.mxu0 0.0
        %659 = vmatpush1.msra.mxu0 0.0
        %660 = vmatprep.subr.mxu0 0.0
        %661 = vmatpush1.msra.mxu0 0.0
        %662 = vmatprep.subr.mxu0 0.0
        %663 = vmatpush1.msra.mxu0 0.0
        %664 = vmatprep.subr.mxu0 0.0
        %665 = vmatpush1.msra.mxu0 0.0
        %666 = vmatprep.mubr.f32.mxu0 0.0
        %667 = vmatmul.mubr.f32.gmra.mrb[0].mxu0 %v585
        %v668 = vpop.f32.mrb[0].mxu0
        %v669 = vadd.f32 0.0, %v668
        %v670 = vpop.f32.mrb[0].mxu0
        %671 = vdwg.mxu0
        %v672 = vmax.f32 %v669, 1e-05
        %v673 = vlog2.pop %v672
        %v674 = vmul.f32 %v673, 0.6931472
        %675 = vst [vmem:[%s236] sm:$0xff] %v674
        %s676 = sand.u32 %s124, 1
        %s677 = scalar_lea.sflag [#allocation4], %s676
        %s678 = sand.u32 %s124, 1
        %s679 = smul.addr %s678, 8
        %s680 = scalar_lea.vmem [#allocation7], %s679
        // Predicated region
        $region45: #{tpu_custom_call.1} parent=35 // pred_check
          %p681 = pneg %p134
        $region46: #{tpu_custom_call.1} parent=35 // pred_check_branch
          %683 = sbr.rel (%p681) target = $region48
        $region47: #{tpu_custom_call.1} parent=35 // pred_region
          %s685 = ssub.s32 128, 128
          %686 = vsyncadd %s677, %s685
          %s687 = smul.addr %s20, 128
          %s688 = scalar_lea.hbm %s4, %s687
          %s690 = sshll.u32 %s680, 4
          %s691 = int_to_ptr.vmem [resolvable:$true] %s690
          %693 = dma.vmem_to_hbm [thread:$0]  %s691, 128, %s688, %s677
        $region48: #{tpu_custom_call.1} parent=35 // pred_fallthru
          _
      $region36: #{tpu_custom_call.1} parent=5 // pred_fallthru
        _
      %p694 = scmp.le.s32.totalorder 2, %s15
      // Predicated region
      $region49: #{tpu_custom_call.1} parent=5 // pred_check
        %p695 = pneg %p694
      $region50: #{tpu_custom_call.1} parent=5 // pred_check_branch
        %697 = sbr.rel (%p695) target = $region52
      $region51: #{tpu_custom_call.1} parent=5 // pred_region
        %s698 = ssub.s32 %s15, 2
        // Predicated region
        $region53: #{tpu_custom_call.1} parent=51 // pred_check
          %p699 = pneg %p140
        $region54: #{tpu_custom_call.1} parent=51 // pred_check_branch
          %701 = sbr.rel (%p699) target = $region56
        $region55: #{tpu_custom_call.1} parent=51 // pred_region
          %s702 = sand.u32 %s125, 1
          %s703 = scalar_lea.sflag [#allocation4], %s702
          %s704 = sand.u32 %s125, 1
          %s705 = smul.addr %s704, 8
          %s706 = scalar_lea.vmem [#allocation7], %s705
          %707 = dma.done %s703, 128
        $region56: #{tpu_custom_call.1} parent=51 // pred_fallthru
          _
      $region52: #{tpu_custom_call.1} parent=5 // pred_fallthru
        _
    $region6: #{tpu_custom_call.1} parent=1 // loop_footer
      %s19 = sadd.s32 1, %s15
    $region7: #{tpu_custom_call.1} parent=1 // loop_footer_branch
      %14 = sbr.rel target = $region3
    $region8: #{tpu_custom_call.1} parent=1 // loop_exit
      _
    %708 = vsyncpa [#allocation3], 1
    %s709 = scalar_lea.sflag [#allocation3], 1
    %710 = vsyncpa %s709, 1
    %711 = vsyncpa [#allocation6], 1
    %712 = vsyncpa [#allocation4], 1
    %s713 = scalar_lea.sflag [#allocation4], 1
    %714 = vsyncpa %s713, 1

// kernel: tpu_custom_call.1
$region0: #{tpu_custom_call.1}
  #allocation0 [shape = 'u32[]', space=smem, size = 0x4, offset = 0x4, fixed_abs, tag = 'smem constant byte address 0x4 - core index']
  #allocation1 [shape = 'u32[144,128]{1,0:T(1,128)}', space=vmem, size = 0x12000, scoped, tag = 'internal scratch']
  %s0 = inlined_call_operand.vmem [shape: f32[24,16], index: 0, kind: input, shape index: {}]
  %s1 = inlined_call_operand.vmem [shape: f32[24,16], index: 1, kind: input, shape index: {}]
  %s2 = inlined_call_operand.hbm [shape: f32[64,256], index: 2, kind: input, shape index: {}]
  %s3 = inlined_call_operand.hbm [shape: f32[128,128], index: 3, kind: input, shape index: {}]
  %s4 = inlined_call_operand.hbm [shape: f32[16,128], index: 4, kind: output, shape index: {}]
  %s5 = sld [smem:[#allocation0]]
  $region57: #{tpu_custom_call.1} parent=0
    _
  %s7 = ssub.s32 1, %s5
  %s8 = scalar_select 0, %s7, %s5
  $region1: #{tpu_custom_call.1} parent=0
    #allocation2 [shape = 'u8[65536]{0}', space=vmem, size = 0x10000, scoped, tag = 'input window, operand 2, single buffered']
    #allocation3 [shape = 's32[2]{0}', space=sflag, size = 0x8, scoped, tag = 'scoped memory for tpu_custom_call.1']
    #allocation4 [shape = 's32[2]{0}', space=sflag, size = 0x8, scoped, tag = 'scoped memory for tpu_custom_call.1']
    #allocation5 [shape = 'u8[65536]{0}', space=vmem, size = 0x10000, scoped, tag = 'input window, operand 3, single buffered']
    #allocation6 [shape = 's32[1]{0}', space=sflag, size = 0x4, scoped, tag = 'scoped memory for tpu_custom_call.1']
    #allocation7 [shape = 'u8[8192]{0}', space=vmem, size = 0x2000, scoped, tag = 'output window, operand 0']
    %9 = vsyncpa [#allocation3], 0
    %10 = vsyncpa [#allocation6], 0
    %11 = vsyncpa [#allocation4], 0
    %s12 = scalar_lea.sflag [#allocation4], 1
    %13 = vsyncpa %s12, 0
    loop: start=0, step=1, limit=4
    $region2: #{tpu_custom_call.1} parent=1 // loop_pre_header
      _
    $region3: #{tpu_custom_call.1} parent=1 // loop_header
      %s15 = sphi 0, %s19
      %p16 = scmp.ge.s32.totalorder %s15, 4
      %s25 = sphi 0, %s27
      %s28 = sphi 0, %s25
      %s29 = sphi 0, %s28
      %s45 = sphi 0, %s29
      %s53 = sphi 0, %s55
      %s56 = sphi 0, %s53
      %s57 = sphi 0, %s56
      %s73 = sphi 0, %s57
      %s77 = sphi 0, %s77
      %s79 = sphi 0, %s77
      %s80 = sphi 0, %s79
      %s94 = sphi 0, %s80
      %s98 = sphi 0, %s98
      %s100 = sphi 0, %s98
      %s101 = sphi 0, %s100
      %s115 = sphi 0, %s101
      %s121 = sphi 0, %s123
      %s124 = sphi 0, %s121
      %s125 = sphi 0, %s124
      %s141 = sphi 0, %s125
    $region4: #{tpu_custom_call.1} parent=1 // loop_header_branch
      %18 = sbr.rel (%p16) target = $region8
    $region5: #{tpu_custom_call.1} parent=1 // loop_body
      %s20 = ssub.s32 %s15, 1
      %s21 = ssub.s32 %s15, 2
      %s22 = sadd.s32 %s15, 1
      %s23 = ssub.s32 %s15, %s22
      %p24 = scmp.eq.s32.totalorder %s23, 0
      %s26 = sadd.s32 %s25, 1
      %s27 = scalar_select %p24, %s25, %s26
      %p30 = pneg %p24
      %p31 = scmp.eq.s32.totalorder %s15, 1
      %p32 = por %p30, %p31
      %p33 = scmp.ne.s32.totalorder %s25, %s28
      %p34 = scmp.eq.s32.totalorder %s15, 0
      %p35 = por %p33, %p34
      %p36 = scmp.ne.s32.totalorder %s25, %s28
      %p37 = scmp.eq.s32.totalorder %s20, 1
      %p38 = por %p36, %p37
      %p39 = scmp.ne.s32.totalorder %s28, %s29
      %p40 = scmp.eq.s32.totalorder %s20, 0
      %p41 = por %p39, %p40
      %p42 = scmp.ne.s32.totalorder %s28, %s29
      %p43 = scmp.eq.s32.totalorder %s21, 1
      %p44 = por %p42, %p43
      %p46 = scmp.ne.s32.totalorder %s29, %s45
      %p47 = scmp.eq.s32.totalorder %s21, 0
      %p48 = por %p46, %p47
      %s49 = sadd.s32 %s15, 1
      %s50 = sadd.s32 %s22, 1
      %s51 = ssub.s32 %s49, %s50
      %p52 = scmp.eq.s32.totalorder %s51, 0
      %s54 = sadd.s32 %s53, 1
      %s55 = scalar_select %p52, %s53, %s54
      %p58 = pneg %p52
      %p59 = scmp.eq.s32.totalorder %s15, 1
      %p60 = por %p58, %p59
      %p61 = scmp.ne.s32.totalorder %s53, %s56
      %p62 = scmp.eq.s32.totalorder %s15, 0
      %p63 = por %p61, %p62
      %p64 = scmp.ne.s32.totalorder %s53, %s56
      %p65 = scmp.eq.s32.totalorder %s20, 1
      %p66 = por %p64, %p65
      %p67 = scmp.ne.s32.totalorder %s56, %s57
      %p68 = scmp.eq.s32.totalorder %s20, 0
      %p69 = por %p67, %p68
      %p70 = scmp.ne.s32.totalorder %s56, %s57
      %p71 = scmp.eq.s32.totalorder %s21, 1
      %p72 = por %p70, %p71
      %p74 = scmp.ne.s32.totalorder %s57, %s73
      %p75 = scmp.eq.s32.totalorder %s21, 0
      %p76 = por %p74, %p75
      %s78 = sadd.s32 %s77, 1
      %p81 = scmp.eq.s32.totalorder %s15, 1
      %p82 = scmp.ne.s32.totalorder %s77, %s79
      %p83 = scmp.eq.s32.totalorder %s15, 0
      %p84 = por %p82, %p83
      %p85 = scmp.ne.s32.totalorder %s77, %s79
      %p86 = scmp.eq.s32.totalorder %s20, 1
      %p87 = por %p85, %p86
      %p88 = scmp.ne.s32.totalorder %s79, %s80
      %p89 = scmp.eq.s32.totalorder %s20, 0
      %p90 = por %p88, %p89
      %p91 = scmp.ne.s32.totalorder %s79, %s80
      %p92 = scmp.eq.s32.totalorder %s21, 1
      %p93 = por %p91, %p92
      %p95 = scmp.ne.s32.totalorder %s80, %s94
      %p96 = scmp.eq.s32.totalorder %s21, 0
      %p97 = por %p95, %p96
      %s99 = sadd.s32 %s98, 1
      %p102 = scmp.eq.s32.totalorder %s15, 1
      %p103 = scmp.ne.s32.totalorder %s98, %s100
      %p104 = scmp.eq.s32.totalorder %s15, 0
      %p105 = por %p103, %p104
      %p106 = scmp.ne.s32.totalorder %s98, %s100
      %p107 = scmp.eq.s32.totalorder %s20, 1
      %p108 = por %p106, %p107
      %p109 = scmp.ne.s32.totalorder %s100, %s101
      %p110 = scmp.eq.s32.totalorder %s20, 0
      %p111 = por %p109, %p110
      %p112 = scmp.ne.s32.totalorder %s100, %s101
      %p113 = scmp.eq.s32.totalorder %s21, 1
      %p114 = por %p112, %p113
      %p116 = scmp.ne.s32.totalorder %s101, %s115
      %p117 = scmp.eq.s32.totalorder %s21, 0
      %p118 = por %p116, %p117
      %s119 = ssub.s32 %s15, %s22
      %p120 = scmp.eq.s32.totalorder %s119, 0
      %s122 = sadd.s32 %s121, 1
      %s123 = scalar_select %p120, %s121, %s122
      %p126 = pneg %p120
      %p127 = scmp.eq.s32.totalorder %s15, 1
      %p128 = por %p126, %p127
      %p129 = scmp.ne.s32.totalorder %s121, %s124
      %p130 = scmp.eq.s32.totalorder %s15, 0
      %p131 = por %p129, %p130
      %p132 = scmp.ne.s32.totalorder %s121, %s124
      %p133 = scmp.eq.s32.totalorder %s20, 1
      %p134 = por %p132, %p133
      %p135 = scmp.ne.s32.totalorder %s124, %s125
      %p136 = scmp.eq.s32.totalorder %s20, 0
      %p137 = por %p135, %p136
      %p138 = scmp.ne.s32.totalorder %s124, %s125
      %p139 = scmp.eq.s32.totalorder %s21, 1
      %p140 = por %p138, %p139
      %p142 = scmp.ne.s32.totalorder %s125, %s141
      %p143 = scmp.eq.s32.totalorder %s21, 0
      %p144 = por %p142, %p143
      %p145 = scmp.le.s32.totalorder 1, %s15
      %p146 = scmp.lt.s32.totalorder %s15, 3
      %p147 = pnand %p145, %p146
      %p148 = pneg %p147
      // Predicated region
      $region9: #{tpu_custom_call.1} parent=5 // pred_check
        _
      $region10: #{tpu_custom_call.1} parent=5 // pred_check_branch
        %150 = sbr.rel (%p147) target = $region12
      $region11: #{tpu_custom_call.1} parent=5 // pred_region
        %s151 = ssub.s32 %s15, 1
        // Predicated region
        $region13: #{tpu_custom_call.1} parent=11 // pred_check
          %p152 = pneg %p90
        $region14: #{tpu_custom_call.1} parent=11 // pred_check_branch
          %154 = sbr.rel (%p152) target = $region16
        $region15: #{tpu_custom_call.1} parent=11 // pred_region
          %s156 = ssub.s32 2048, 2048
          %157 = vsyncadd [#allocation3], %s156
          %s158 = sshll.u32 [#allocation2], 4
          %s159 = int_to_ptr.vmem [resolvable:$true] %s158
          %164 = dma.hbm_to_vmem [thread:$0]  %s2, 2048, %s159, [#allocation3], 256, 256, 16
        $region16: #{tpu_custom_call.1} parent=11 // pred_fallthru
          _
        // Predicated region
        $region17: #{tpu_custom_call.1} parent=11 // pred_check
          %p165 = pneg %p111
        $region18: #{tpu_custom_call.1} parent=11 // pred_check_branch
          %167 = sbr.rel (%p165) target = $region20
        $region19: #{tpu_custom_call.1} parent=11 // pred_region
          %s169 = ssub.s32 2048, 2048
          %170 = vsyncadd [#allocation6], %s169
          %s171 = sshll.u32 [#allocation5], 4
          %s172 = int_to_ptr.vmem [resolvable:$true] %s171
          %177 = dma.hbm_to_vmem [thread:$0]  %s3, 2048, %s172, [#allocation6], 128, 128, 8
        $region20: #{tpu_custom_call.1} parent=11 // pred_fallthru
          _
      $region12: #{tpu_custom_call.1} parent=5 // pred_fallthru
        _
      %p178 = scmp.lt.s32.totalorder %s15, 2
      // Predicated region
      $region21: #{tpu_custom_call.1} parent=5 // pred_check
        %p179 = pneg %p178
      $region22: #{tpu_custom_call.1} parent=5 // pred_check_branch
        %181 = sbr.rel (%p179) target = $region24
      $region23: #{tpu_custom_call.1} parent=5 // pred_region
        // Predicated region
        $region25: #{tpu_custom_call.1} parent=23 // pred_check
          %p182 = pneg %p35
        $region26: #{tpu_custom_call.1} parent=23 // pred_check_branch
          %184 = sbr.rel (%p182) target = $region28
        $region27: #{tpu_custom_call.1} parent=23 // pred_region
          %p185 = scmp.lt.s32.totalorder %s15, 2
          %s186 = scalar_select %p185, %s15, 2
          %s187 = smul.addr %s186, 8
          %s188 = scalar_lea.vmem %s0, %s187
        $region28: #{tpu_custom_call.1} parent=23 // pred_fallthru
          _
        // Predicated region
        $region29: #{tpu_custom_call.1} parent=23 // pred_check
          %p189 = pneg %p63
        $region30: #{tpu_custom_call.1} parent=23 // pred_check_branch
          %191 = sbr.rel (%p189) target = $region32
        $region31: #{tpu_custom_call.1} parent=23 // pred_region
          %s192 = sadd.s32 %s15, 1
          %p193 = scmp.lt.s32.totalorder %s192, 2
          %s194 = scalar_select %p193, %s192, 2
          %s195 = smul.addr %s194, 8
          %s196 = scalar_lea.vmem %s1, %s195
          %s197 = sadd.s32 %s15, 1
        $region32: #{tpu_custom_call.1} parent=23 // pred_fallthru
          _
      $region24: #{tpu_custom_call.1} parent=5 // pred_fallthru
        _
      %p198 = scmp.le.s32.totalorder 1, %s15
      %p199 = scmp.lt.s32.totalorder %s15, 3
      %p200 = pnand %p198, %p199
      %p201 = pneg %p200
      // Predicated region
      $region33: #{tpu_custom_call.1} parent=5 // pred_check
        _
      $region34: #{tpu_custom_call.1} parent=5 // pred_check_branch
        %203 = sbr.rel (%p200) target = $region36
      $region35: #{tpu_custom_call.1} parent=5 // pred_region
        %s204 = ssub.s32 %s15, 1
        // Predicated region
        $region37: #{tpu_custom_call.1} parent=35 // pred_check
          %p205 = pneg %p90
        $region38: #{tpu_custom_call.1} parent=35 // pred_check_branch
          %207 = sbr.rel (%p205) target = $region40
        $region39: #{tpu_custom_call.1} parent=35 // pred_region
          %208 = dma.done [#allocation3], 2048
        $region40: #{tpu_custom_call.1} parent=35 // pred_fallthru
          _
        // Predicated region
        $region41: #{tpu_custom_call.1} parent=35 // pred_check
          %p209 = pneg %p111
        $region42: #{tpu_custom_call.1} parent=35 // pred_check_branch
          %211 = sbr.rel (%p209) target = $region44
        $region43: #{tpu_custom_call.1} parent=35 // pred_region
          %212 = dma.done [#allocation6], 2048
        $region44: #{tpu_custom_call.1} parent=35 // pred_fallthru
          _
        %p213 = scmp.lt.s32.totalorder %s20, 2
        %s214 = scalar_select %p213, %s20, 2
        %s215 = smul.addr %s214, 8
        %s216 = scalar_lea.vmem %s0, %s215
        %p217 = pneg %p41
        %p218 = pneg %p38
        %s219 = sadd.s32 %s20, 1
        %p220 = scmp.lt.s32.totalorder %s219, 2
        %s221 = scalar_select %p220, %s219, 2
        %s222 = smul.addr %s221, 8
        %s223 = scalar_lea.vmem %s1, %s222
        %p224 = pneg %p69
        %p225 = pneg %p66
        %p226 = pneg %p90
        %p227 = pneg %p87
        %p228 = pneg %p111
        %p229 = pneg %p108
        %p230 = pneg %p137
        %p231 = pneg %p134
        %s232 = sand.u32 %s124, 1
        %s233 = scalar_lea.sflag [#allocation4], %s232
        %s234 = sand.u32 %s124, 1
        %s235 = smul.addr %s234, 8
        %s236 = scalar_lea.vmem [#allocation7], %s235
        %p237 = scmp.lt.s32.totalorder %s20, 2
        %s238 = scalar_select %p237, %s20, 2
        %s239 = smul.addr %s238, 8
        %s240 = scalar_lea.vmem %s0, %s239
        %s241 = sadd.s32 %s20, 1
        %p242 = scmp.lt.s32.totalorder %s241, 2
        %s243 = scalar_select %p242, %s241, 2
        %s244 = smul.addr %s243, 8
        %s245 = scalar_lea.vmem %s1, %s244
        %s246 = sadd.s32 %s20, 1
        %v247 = vld [vmem:[%s240] sm:$0xff]
        %v248 = vld [vmem:[%s245] sm:$0x7]
        %v249 = vld [vmem:[#allocation2] sm:$0xff]
        %v250 = vld [vmem:[#allocation2 + $0x8] sm:$0xff]
        %v251 = vld [vmem:[#allocation2 + $0x10] sm:$0xff]
        %v252 = vld [vmem:[#allocation2 + $0x18] sm:$0xff]
        %v253 = vld [vmem:[#allocation2 + $0x20] sm:$0xff]
        %v254 = vld [vmem:[#allocation2 + $0x28] sm:$0xff]
        %v255 = vld [vmem:[#allocation2 + $0x30] sm:$0xff]
        %v256 = vld [vmem:[#allocation2 + $0x38] sm:$0xff]
        %vm259 = vcmask 1046528
        %v260 = vrot.slane %v247, 1
        %v261 = vrot.slane %v248, 1
        %v262 = vsel %vm259, %v260, %v261
        %vm263 = vcmask 130048
        %v264 = vsel %vm263, %v262, 0
        %266 = vmatprep.subr.mxu0 %v254
        %267 = vmatpush1.msra.mxu0 %v253
        %268 = vmatprep.subr.mxu0 %v256
        %269 = vmatpush1.msra.mxu0 %v255
        %270 = vmatprep.subr.mxu0 0.0
        %271 = vmatpush1.msra.mxu0 0.0
        %272 = vmatprep.subr.mxu0 0.0
        %273 = vmatpush1.msra.mxu0 0.0
        %274 = vmatprep.subr.mxu0 0.0
        %275 = vmatpush1.msra.mxu0 0.0
        %276 = vmatprep.subr.mxu0 0.0
        %277 = vmatpush1.msra.mxu0 0.0
        %278 = vmatprep.subr.mxu0 0.0
        %279 = vmatpush1.msra.mxu0 0.0
        %280 = vmatprep.subr.mxu0 0.0
        %281 = vmatpush1.msra.mxu0 0.0
        %282 = vmatprep.subr.mxu0 0.0
        %283 = vmatpush1.msra.mxu0 0.0
        %284 = vmatprep.subr.mxu0 0.0
        %285 = vmatpush1.msra.mxu0 0.0
        %286 = vmatprep.subr.mxu0 0.0
        %287 = vmatpush1.msra.mxu0 0.0
        %288 = vmatprep.subr.mxu0 0.0
        %289 = vmatpush1.msra.mxu0 0.0
        %290 = vmatprep.subr.mxu0 0.0
        %291 = vmatpush1.msra.mxu0 0.0
        %292 = vmatprep.subr.mxu0 0.0
        %293 = vmatpush1.msra.mxu0 0.0
        %294 = vmatprep.subr.mxu0 0.0
        %295 = vmatpush1.msra.mxu0 0.0
        %296 = vmatprep.subr.mxu0 0.0
        %297 = vmatpush1.msra.mxu0 0.0
        %298 = vmatprep.subr.mxu0 0.0
        %299 = vmatpush1.msra.mxu0 0.0
        %300 = vmatprep.subr.mxu0 0.0
        %301 = vmatpush1.msra.mxu0 0.0
        %302 = vmatprep.subr.mxu0 0.0
        %303 = vmatpush1.msra.mxu0 0.0
        %304 = vmatprep.subr.mxu0 0.0
        %305 = vmatpush1.msra.mxu0 0.0
        %306 = vmatprep.subr.mxu0 0.0
        %307 = vmatpush1.msra.mxu0 0.0
        %308 = vmatprep.subr.mxu0 0.0
        %309 = vmatpush1.msra.mxu0 0.0
        %310 = vmatprep.subr.mxu0 0.0
        %311 = vmatpush1.msra.mxu0 0.0
        %312 = vmatprep.subr.mxu0 0.0
        %313 = vmatpush1.msra.mxu0 0.0
        %314 = vmatprep.subr.mxu0 0.0
        %315 = vmatpush1.msra.mxu0 0.0
        %316 = vmatprep.subr.mxu0 0.0
        %317 = vmatpush1.msra.mxu0 0.0
        %318 = vmatprep.subr.mxu0 0.0
        %319 = vmatpush1.msra.mxu0 0.0
        %320 = vmatprep.subr.mxu0 0.0
        %321 = vmatpush1.msra.mxu0 0.0
        %322 = vmatprep.subr.mxu0 0.0
        %323 = vmatpush1.msra.mxu0 0.0
        %324 = vmatprep.subr.mxu0 0.0
        %325 = vmatpush1.msra.mxu0 0.0
        %326 = vmatprep.subr.mxu0 0.0
        %327 = vmatpush1.msra.mxu0 0.0
        %328 = vmatprep.subr.mxu0 0.0
        %329 = vmatpush1.msra.mxu0 0.0
        %330 = vmatprep.mubr.f32.mxu0 0.0
        %331 = vmatmul.mubr.f32.gmra.mrb[0].mxu0 %v264
        %v332 = vpop.f32.mrb[0].mxu0
        %v333 = vadd.f32 0.0, %v332
        %v334 = vpop.f32.mrb[0].mxu0
        %v335 = vadd.f32 0.0, %v334
        %336 = vdwg.mxu0
        %v337 = vsel %vm263, %v247, 0
        %339 = vmatprep.subr.mxu0 %v250
        %340 = vmatpush1.msra.mxu0 %v249
        %341 = vmatprep.subr.mxu0 %v252
        %342 = vmatpush1.msra.mxu0 %v251
        %343 = vmatprep.subr.mxu0 0.0
        %344 = vmatpush1.msra.mxu0 0.0
        %345 = vmatprep.subr.mxu0 0.0
        %346 = vmatpush1.msra.mxu0 0.0
        %347 = vmatprep.subr.mxu0 0.0
        %348 = vmatpush1.msra.mxu0 0.0
        %349 = vmatprep.subr.mxu0 0.0
        %350 = vmatpush1.msra.mxu0 0.0
        %351 = vmatprep.subr.mxu0 0.0
        %352 = vmatpush1.msra.mxu0 0.0
        %353 = vmatprep.subr.mxu0 0.0
        %354 = vmatpush1.msra.mxu0 0.0
        %355 = vmatprep.subr.mxu0 0.0
        %356 = vmatpush1.msra.mxu0 0.0
        %357 = vmatprep.subr.mxu0 0.0
        %358 = vmatpush1.msra.mxu0 0.0
        %359 = vmatprep.subr.mxu0 0.0
        %360 = vmatpush1.msra.mxu0 0.0
        %361 = vmatprep.subr.mxu0 0.0
        %362 = vmatpush1.msra.mxu0 0.0
        %363 = vmatprep.subr.mxu0 0.0
        %364 = vmatpush1.msra.mxu0 0.0
        %365 = vmatprep.subr.mxu0 0.0
        %366 = vmatpush1.msra.mxu0 0.0
        %367 = vmatprep.subr.mxu0 0.0
        %368 = vmatpush1.msra.mxu0 0.0
        %369 = vmatprep.subr.mxu0 0.0
        %370 = vmatpush1.msra.mxu0 0.0
        %371 = vmatprep.subr.mxu0 0.0
        %372 = vmatpush1.msra.mxu0 0.0
        %373 = vmatprep.subr.mxu0 0.0
        %374 = vmatpush1.msra.mxu0 0.0
        %375 = vmatprep.subr.mxu0 0.0
        %376 = vmatpush1.msra.mxu0 0.0
        %377 = vmatprep.subr.mxu0 0.0
        %378 = vmatpush1.msra.mxu0 0.0
        %379 = vmatprep.subr.mxu0 0.0
        %380 = vmatpush1.msra.mxu0 0.0
        %381 = vmatprep.subr.mxu0 0.0
        %382 = vmatpush1.msra.mxu0 0.0
        %383 = vmatprep.subr.mxu0 0.0
        %384 = vmatpush1.msra.mxu0 0.0
        %385 = vmatprep.subr.mxu0 0.0
        %386 = vmatpush1.msra.mxu0 0.0
        %387 = vmatprep.subr.mxu0 0.0
        %388 = vmatpush1.msra.mxu0 0.0
        %389 = vmatprep.subr.mxu0 0.0
        %390 = vmatpush1.msra.mxu0 0.0
        %391 = vmatprep.subr.mxu0 0.0
        %392 = vmatpush1.msra.mxu0 0.0
        %393 = vmatprep.subr.mxu0 0.0
        %394 = vmatpush1.msra.mxu0 0.0
        %395 = vmatprep.subr.mxu0 0.0
        %396 = vmatpush1.msra.mxu0 0.0
        %397 = vmatprep.subr.mxu0 0.0
        %398 = vmatpush1.msra.mxu0 0.0
        %399 = vmatprep.subr.mxu0 0.0
        %400 = vmatpush1.msra.mxu0 0.0
        %401 = vmatprep.subr.mxu0 0.0
        %402 = vmatpush1.msra.mxu0 0.0
        %403 = vmatprep.mubr.f32.mxu0 0.0
        %404 = vmatmul.mubr.f32.gmra.mrb[0].mxu0 %v337
        %v405 = vpop.f32.mrb[0].mxu0
        %v406 = vadd.f32 %v333, %v405
        %v407 = vpop.f32.mrb[0].mxu0
        %v408 = vadd.f32 %v335, %v407
        %409 = vdwg.mxu0
        %v410 = vld [vmem:[#allocation2 + $0x40] sm:$0xff]
        %v411 = vld [vmem:[#allocation2 + $0x48] sm:$0xff]
        %v412 = vld [vmem:[#allocation2 + $0x50] sm:$0xff]
        %v413 = vld [vmem:[#allocation2 + $0x58] sm:$0xff]
        %vm414 = vcmask 1045504
        %v415 = vrot.slane %v247, 2
        %v416 = vrot.slane %v248, 2
        %v417 = vsel %vm414, %v415, %v416
        %v418 = vsel %vm263, %v417, 0
        %420 = vmatprep.subr.mxu0 %v411
        %421 = vmatpush1.msra.mxu0 %v410
        %422 = vmatprep.subr.mxu0 %v413
        %423 = vmatpush1.msra.mxu0 %v412
        %424 = vmatprep.subr.mxu0 0.0
        %425 = vmatpush1.msra.mxu0 0.0
        %426 = vmatprep.subr.mxu0 0.0
        %427 = vmatpush1.msra.mxu0 0.0
        %428 = vmatprep.subr.mxu0 0.0
        %429 = vmatpush1.msra.mxu0 0.0
        %430 = vmatprep.subr.mxu0 0.0
        %431 = vmatpush1.msra.mxu0 0.0
        %432 = vmatprep.subr.mxu0 0.0
        %433 = vmatpush1.msra.mxu0 0.0
        %434 = vmatprep.subr.mxu0 0.0
        %435 = vmatpush1.msra.mxu0 0.0
        %436 = vmatprep.subr.mxu0 0.0
        %437 = vmatpush1.msra.mxu0 0.0
        %438 = vmatprep.subr.mxu0 0.0
        %439 = vmatpush1.msra.mxu0 0.0
        %440 = vmatprep.subr.mxu0 0.0
        %441 = vmatpush1.msra.mxu0 0.0
        %442 = vmatprep.subr.mxu0 0.0
        %443 = vmatpush1.msra.mxu0 0.0
        %444 = vmatprep.subr.mxu0 0.0
        %445 = vmatpush1.msra.mxu0 0.0
        %446 = vmatprep.subr.mxu0 0.0
        %447 = vmatpush1.msra.mxu0 0.0
        %448 = vmatprep.subr.mxu0 0.0
        %449 = vmatpush1.msra.mxu0 0.0
        %450 = vmatprep.subr.mxu0 0.0
        %451 = vmatpush1.msra.mxu0 0.0
        %452 = vmatprep.subr.mxu0 0.0
        %453 = vmatpush1.msra.mxu0 0.0
        %454 = vmatprep.subr.mxu0 0.0
        %455 = vmatpush1.msra.mxu0 0.0
        %456 = vmatprep.subr.mxu0 0.0
        %457 = vmatpush1.msra.mxu0 0.0
        %458 = vmatprep.subr.mxu0 0.0
        %459 = vmatpush1.msra.mxu0 0.0
        %460 = vmatprep.subr.mxu0 0.0
        %461 = vmatpush1.msra.mxu0 0.0
        %462 = vmatprep.subr.mxu0 0.0
        %463 = vmatpush1.msra.mxu0 0.0
        %464 = vmatprep.subr.mxu0 0.0
        %465 = vmatpush1.msra.mxu0 0.0
        %466 = vmatprep.subr.mxu0 0.0
        %467 = vmatpush1.msra.mxu0 0.0
        %468 = vmatprep.subr.mxu0 0.0
        %469 = vmatpush1.msra.mxu0 0.0
        %470 = vmatprep.subr.mxu0 0.0
        %471 = vmatpush1.msra.mxu0 0.0
        %472 = vmatprep.subr.mxu0 0.0
        %473 = vmatpush1.msra.mxu0 0.0
        %474 = vmatprep.subr.mxu0 0.0
        %475 = vmatpush1.msra.mxu0 0.0
        %476 = vmatprep.subr.mxu0 0.0
        %477 = vmatpush1.msra.mxu0 0.0
        %478 = vmatprep.subr.mxu0 0.0
        %479 = vmatpush1.msra.mxu0 0.0
        %480 = vmatprep.subr.mxu0 0.0
        %481 = vmatpush1.msra.mxu0 0.0
        %482 = vmatprep.subr.mxu0 0.0
        %483 = vmatpush1.msra.mxu0 0.0
        %484 = vmatprep.mubr.f32.mxu0 0.0
        %485 = vmatmul.mubr.f32.gmra.mrb[0].mxu0 %v418
        %v486 = vpop.f32.mrb[0].mxu0
        %v487 = vadd.f32 0.0, %v486
        %v488 = vpop.f32.mrb[0].mxu0
        %v489 = vadd.f32 0.0, %v488
        %490 = vdwg.mxu0
        %v491 = vadd.f32 %v406, %v487
        %v492 = vadd.f32 %v408, %v489
        %v493 = vld [vmem:[#allocation2 + $0x60] sm:$0xff]
        %v494 = vld [vmem:[#allocation2 + $0x68] sm:$0xff]
        %v495 = vld [vmem:[#allocation2 + $0x70] sm:$0xff]
        %v496 = vld [vmem:[#allocation2 + $0x78] sm:$0xff]
        %vm497 = vcmask 1044480
        %v498 = vrot.slane %v247, 3
        %v499 = vrot.slane %v248, 3
        %v500 = vsel %vm497, %v498, %v499
        %v501 = vsel %vm263, %v500, 0
        %503 = vmatprep.subr.mxu0 %v494
        %504 = vmatpush1.msra.mxu0 %v493
        %505 = vmatprep.subr.mxu0 %v496
        %506 = vmatpush1.msra.mxu0 %v495
        %507 = vmatprep.subr.mxu0 0.0
        %508 = vmatpush1.msra.mxu0 0.0
        %509 = vmatprep.subr.mxu0 0.0
        %510 = vmatpush1.msra.mxu0 0.0
        %511 = vmatprep.subr.mxu0 0.0
        %512 = vmatpush1.msra.mxu0 0.0
        %513 = vmatprep.subr.mxu0 0.0
        %514 = vmatpush1.msra.mxu0 0.0
        %515 = vmatprep.subr.mxu0 0.0
        %516 = vmatpush1.msra.mxu0 0.0
        %517 = vmatprep.subr.mxu0 0.0
        %518 = vmatpush1.msra.mxu0 0.0
        %519 = vmatprep.subr.mxu0 0.0
        %520 = vmatpush1.msra.mxu0 0.0
        %521 = vmatprep.subr.mxu0 0.0
        %522 = vmatpush1.msra.mxu0 0.0
        %523 = vmatprep.subr.mxu0 0.0
        %524 = vmatpush1.msra.mxu0 0.0
        %525 = vmatprep.subr.mxu0 0.0
        %526 = vmatpush1.msra.mxu0 0.0
        %527 = vmatprep.subr.mxu0 0.0
        %528 = vmatpush1.msra.mxu0 0.0
        %529 = vmatprep.subr.mxu0 0.0
        %530 = vmatpush1.msra.mxu0 0.0
        %531 = vmatprep.subr.mxu0 0.0
        %532 = vmatpush1.msra.mxu0 0.0
        %533 = vmatprep.subr.mxu0 0.0
        %534 = vmatpush1.msra.mxu0 0.0
        %535 = vmatprep.subr.mxu0 0.0
        %536 = vmatpush1.msra.mxu0 0.0
        %537 = vmatprep.subr.mxu0 0.0
        %538 = vmatpush1.msra.mxu0 0.0
        %539 = vmatprep.subr.mxu0 0.0
        %540 = vmatpush1.msra.mxu0 0.0
        %541 = vmatprep.subr.mxu0 0.0
        %542 = vmatpush1.msra.mxu0 0.0
        %543 = vmatprep.subr.mxu0 0.0
        %544 = vmatpush1.msra.mxu0 0.0
        %545 = vmatprep.subr.mxu0 0.0
        %546 = vmatpush1.msra.mxu0 0.0
        %547 = vmatprep.subr.mxu0 0.0
        %548 = vmatpush1.msra.mxu0 0.0
        %549 = vmatprep.subr.mxu0 0.0
        %550 = vmatpush1.msra.mxu0 0.0
        %551 = vmatprep.subr.mxu0 0.0
        %552 = vmatpush1.msra.mxu0 0.0
        %553 = vmatprep.subr.mxu0 0.0
        %554 = vmatpush1.msra.mxu0 0.0
        %555 = vmatprep.subr.mxu0 0.0
        %556 = vmatpush1.msra.mxu0 0.0
        %557 = vmatprep.subr.mxu0 0.0
        %558 = vmatpush1.msra.mxu0 0.0
        %559 = vmatprep.subr.mxu0 0.0
        %560 = vmatpush1.msra.mxu0 0.0
        %561 = vmatprep.subr.mxu0 0.0
        %562 = vmatpush1.msra.mxu0 0.0
        %563 = vmatprep.subr.mxu0 0.0
        %564 = vmatpush1.msra.mxu0 0.0
        %565 = vmatprep.subr.mxu0 0.0
        %566 = vmatpush1.msra.mxu0 0.0
        %567 = vmatprep.mubr.f32.mxu0 0.0
        %568 = vmatmul.mubr.f32.gmra.mrb[0].mxu0 %v501
        %v569 = vpop.f32.mrb[0].mxu0
        %v570 = vadd.f32 0.0, %v569
        %v571 = vpop.f32.mrb[0].mxu0
        %v572 = vadd.f32 0.0, %v571
        %573 = vdwg.mxu0
        %v574 = vadd.f32 %v491, %v570
        %v575 = vadd.f32 %v492, %v572
        %v576 = vmul.f32 %v574, %v574
        %v577 = vmul.f32 %v575, %v575
        %v578 = vadd.f32 %v576, %v577
        %v579 = vrsqrt.pop %v578
        %v580 = vmul.f32 %v578, %v579
        %vm581 = vcmp.eq.f32.partialorder %v578, inf
        %v582 = vsel %vm581, %v578, %v580
        %vm583 = vcmp.eq.f32.partialorder %v578, 0.0
        %v584 = vand.u32 %v578, 2147483648
        %v585 = vsel %vm583, %v584, %v582
        %v586 = vld [vmem:[#allocation5] sm:$0xff]
        %v587 = vld [vmem:[#allocation5 + $0x8] sm:$0xff]
        %v588 = vld [vmem:[#allocation5 + $0x10] sm:$0xff]
        %v589 = vld [vmem:[#allocation5 + $0x18] sm:$0xff]
        %v590 = vld [vmem:[#allocation5 + $0x20] sm:$0xff]
        %v591 = vld [vmem:[#allocation5 + $0x28] sm:$0xff]
        %v592 = vld [vmem:[#allocation5 + $0x30] sm:$0xff]
        %v593 = vld [vmem:[#allocation5 + $0x38] sm:$0xff]
        %v594 = vld [vmem:[#allocation5 + $0x40] sm:$0xff]
        %v595 = vld [vmem:[#allocation5 + $0x48] sm:$0xff]
        %v596 = vld [vmem:[#allocation5 + $0x50] sm:$0xff]
        %v597 = vld [vmem:[#allocation5 + $0x58] sm:$0xff]
        %v598 = vld [vmem:[#allocation5 + $0x60] sm:$0xff]
        %v599 = vld [vmem:[#allocation5 + $0x68] sm:$0xff]
        %v600 = vld [vmem:[#allocation5 + $0x70] sm:$0xff]
        %v601 = vld [vmem:[#allocation5 + $0x78] sm:$0xff]
        %602 = vmatprep.subr.mxu0 0.0
        %603 = vmatpush1.msra.mxu0 %v586
        %604 = vmatprep.subr.mxu0 0.0
        %605 = vmatpush1.msra.mxu0 %v587
        %606 = vmatprep.subr.mxu0 0.0
        %607 = vmatpush1.msra.mxu0 %v588
        %608 = vmatprep.subr.mxu0 0.0
        %609 = vmatpush1.msra.mxu0 %v589
        %610 = vmatprep.subr.mxu0 0.0
        %611 = vmatpush1.msra.mxu0 %v590
        %612 = vmatprep.subr.mxu0 0.0
        %613 = vmatpush1.msra.mxu0 %v591
        %614 = vmatprep.subr.mxu0 0.0
        %615 = vmatpush1.msra.mxu0 %v592
        %616 = vmatprep.subr.mxu0 0.0
        %617 = vmatpush1.msra.mxu0 %v593
        %618 = vmatprep.subr.mxu0 0.0
        %619 = vmatpush1.msra.mxu0 %v594
        %620 = vmatprep.subr.mxu0 0.0
        %621 = vmatpush1.msra.mxu0 %v595
        %622 = vmatprep.subr.mxu0 0.0
        %623 = vmatpush1.msra.mxu0 %v596
        %624 = vmatprep.subr.mxu0 0.0
        %625 = vmatpush1.msra.mxu0 %v597
        %626 = vmatprep.subr.mxu0 0.0
        %627 = vmatpush1.msra.mxu0 %v598
        %628 = vmatprep.subr.mxu0 0.0
        %629 = vmatpush1.msra.mxu0 %v599
        %630 = vmatprep.subr.mxu0 0.0
        %631 = vmatpush1.msra.mxu0 %v600
        %632 = vmatprep.subr.mxu0 0.0
        %633 = vmatpush1.msra.mxu0 %v601
        %634 = vmatprep.subr.mxu0 0.0
        %635 = vmatpush1.msra.mxu0 0.0
        %636 = vmatprep.subr.mxu0 0.0
        %637 = vmatpush1.msra.mxu0 0.0
        %638 = vmatprep.subr.mxu0 0.0
        %639 = vmatpush1.msra.mxu0 0.0
        %640 = vmatprep.subr.mxu0 0.0
        %641 = vmatpush1.msra.mxu0 0.0
        %642 = vmatprep.subr.mxu0 0.0
        %643 = vmatpush1.msra.mxu0 0.0
        %644 = vmatprep.subr.mxu0 0.0
        %645 = vmatpush1.msra.mxu0 0.0
        %646 = vmatprep.subr.mxu0 0.0
        %647 = vmatpush1.msra.mxu0 0.0
        %648 = vmatprep.subr.mxu0 0.0
        %649 = vmatpush1.msra.mxu0 0.0
        %650 = vmatprep.subr.mxu0 0.0
        %651 = vmatpush1.msra.mxu0 0.0
        %652 = vmatprep.subr.mxu0 0.0
        %653 = vmatpush1.msra.mxu0 0.0
        %654 = vmatprep.subr.mxu0 0.0
        %655 = vmatpush1.msra.mxu0 0.0
        %656 = vmatprep.subr.mxu0 0.0
        %657 = vmatpush1.msra.mxu0 0.0
        %658 = vmatprep.subr.mxu0 0.0
        %659 = vmatpush1.msra.mxu0 0.0
        %660 = vmatprep.subr.mxu0 0.0
        %661 = vmatpush1.msra.mxu0 0.0
        %662 = vmatprep.subr.mxu0 0.0
        %663 = vmatpush1.msra.mxu0 0.0
        %664 = vmatprep.subr.mxu0 0.0
        %665 = vmatpush1.msra.mxu0 0.0
        %666 = vmatprep.mubr.f32.mxu0 0.0
        %667 = vmatmul.mubr.f32.gmra.mrb[0].mxu0 %v585
        %v668 = vpop.f32.mrb[0].mxu0
        %v669 = vadd.f32 0.0, %v668
        %v670 = vpop.f32.mrb[0].mxu0
        %671 = vdwg.mxu0
        %v672 = vmax.f32 %v669, 1e-05
        %v673 = vlog2.pop %v672
        %v674 = vmul.f32 %v673, 0.6931472
        %675 = vst [vmem:[%s236] sm:$0xff] %v674
        %s676 = sand.u32 %s124, 1
        %s677 = scalar_lea.sflag [#allocation4], %s676
        %s678 = sand.u32 %s124, 1
        %s679 = smul.addr %s678, 8
        %s680 = scalar_lea.vmem [#allocation7], %s679
        // Predicated region
        $region45: #{tpu_custom_call.1} parent=35 // pred_check
          %p681 = pneg %p134
        $region46: #{tpu_custom_call.1} parent=35 // pred_check_branch
          %683 = sbr.rel (%p681) target = $region48
        $region47: #{tpu_custom_call.1} parent=35 // pred_region
          %s685 = ssub.s32 128, 128
          %686 = vsyncadd %s677, %s685
          %s687 = smul.addr %s20, 128
          %s688 = scalar_lea.hbm %s4, %s687
          %s690 = sshll.u32 %s680, 4
          %s691 = int_to_ptr.vmem [resolvable:$true] %s690
          %693 = dma.vmem_to_hbm [thread:$0]  %s691, 128, %s688, %s677
        $region48: #{tpu_custom_call.1} parent=35 // pred_fallthru
          _
      $region36: #{tpu_custom_call.1} parent=5 // pred_fallthru
        _
      %p694 = scmp.le.s32.totalorder 2, %s15
      // Predicated region
      $region49: #{tpu_custom_call.1} parent=5 // pred_check
        %p695 = pneg %p694
      $region50: #{tpu_custom_call.1} parent=5 // pred_check_branch
        %697 = sbr.rel (%p695) target = $region52
      $region51: #{tpu_custom_call.1} parent=5 // pred_region
        %s698 = ssub.s32 %s15, 2
        // Predicated region
        $region53: #{tpu_custom_call.1} parent=51 // pred_check
          %p699 = pneg %p140
        $region54: #{tpu_custom_call.1} parent=51 // pred_check_branch
          %701 = sbr.rel (%p699) target = $region56
        $region55: #{tpu_custom_call.1} parent=51 // pred_region
          %s702 = sand.u32 %s125, 1
          %s703 = scalar_lea.sflag [#allocation4], %s702
          %s704 = sand.u32 %s125, 1
          %s705 = smul.addr %s704, 8
          %s706 = scalar_lea.vmem [#allocation7], %s705
          %707 = dma.done %s703, 128
        $region56: #{tpu_custom_call.1} parent=51 // pred_fallthru
          _
      $region52: #{tpu_custom_call.1} parent=5 // pred_fallthru
        _
    $region6: #{tpu_custom_call.1} parent=1 // loop_footer
      %s19 = sadd.s32 1, %s15
    $region7: #{tpu_custom_call.1} parent=1 // loop_footer_branch
      %14 = sbr.rel target = $region3
    $region8: #{tpu_custom_call.1} parent=1 // loop_exit
      _
    %708 = vsyncpa [#allocation3], 1
    %s709 = scalar_lea.sflag [#allocation3], 1
    %710 = vsyncpa %s709, 1
    %711 = vsyncpa [#allocation6], 1
    %712 = vsyncpa [#allocation4], 1
    %s713 = scalar_lea.sflag [#allocation4], 1
    %714 = vsyncpa %s713, 1

</llo_original>
